<compile_context>
chip_gen: v7x
topology: tpu7x:2x2x1
jax: 0.10.0
libtpu: 0.0.40
codegen_flags: <defaults>
</compile_context>

<pallas_src>
import functools
import math

import jax
import jax.numpy as jnp
from jax.experimental import pallas as pl
from jax.experimental.pallas import tpu as pltpu


def _gelu_tanh(x):
    # TODO(synk): PyTorch F.gelu default is exact erf-GELU; tanh approximation is
    # used here (Mosaic-friendly, max deviation ~1e-3).
    c = math.sqrt(2.0 / math.pi)
    return 0.5 * x * (1.0 + jnp.tanh(c * (x + 0.044715 * (x * x * x))))


def _layernorm(x, g, b, eps):
    mu = jnp.mean(x, axis=-1, keepdims=True)
    xc = x - mu
    var = jnp.mean(xc * xc, axis=-1, keepdims=True)
    return xc * jax.lax.rsqrt(var + eps) * g + b


# --------------------------------------------------------------------------
# Kernel 1: LayerNorm1 + fused QKV (+bias, +rel-pos on K/V) + multi-head
#           softmax attention + output projection + residual.
# One batch element per grid step; all weights resident (constant index_map).
# --------------------------------------------------------------------------
def _attn_block_kernel(x_ref, rel_ref, g1_ref, bt1_ref, wqkv_ref, bqkv_ref,
                       wo_ref, bo_ref, r1_ref, *, num_heads, head_dim, hidden,
                       eps, scale, compute_dtype):
    x = x_ref[0]                                                   # (S, D) f32
    rel = rel_ref[0]                                               # (S, D) f32

    xn = _layernorm(x, g1_ref[...], bt1_ref[...], eps)
    qkv = jnp.dot(xn.astype(compute_dtype), wqkv_ref[...],
                  preferred_element_type=jnp.float32) + bqkv_ref[...]  # (S, 3D)

    q = qkv[:, :hidden]
    k = qkv[:, hidden:2 * hidden] + rel
    v = qkv[:, 2 * hidden:] + rel

    ctx_heads = []
    for h in range(num_heads):                       # static unroll over heads
        lo = h * head_dim
        qh = q[:, lo:lo + head_dim].astype(compute_dtype)
        kh = k[:, lo:lo + head_dim].astype(compute_dtype)
        vh = v[:, lo:lo + head_dim].astype(compute_dtype)
        s = jnp.einsum("qd,kd->qk", qh, kh,
                       preferred_element_type=jnp.float32) * scale
        s = s - jnp.max(s, axis=-1, keepdims=True)
        p = jnp.exp(s)
        p = p / jnp.sum(p, axis=-1, keepdims=True)
        ctx_heads.append(jnp.dot(p.astype(compute_dtype), vh,
                                 preferred_element_type=jnp.float32))
    ctx = jnp.concatenate(ctx_heads, axis=-1)                      # (S, D) f32

    attn_out = jnp.dot(ctx.astype(compute_dtype), wo_ref[...],
                       preferred_element_type=jnp.float32) + bo_ref[...]
    r1_ref[0] = attn_out + x                                       # residual 1


# --------------------------------------------------------------------------
# Kernel 2: LayerNorm2 + MLP (GELU) + residual.
# One batch element per grid step; weights resident.
# --------------------------------------------------------------------------
def _mlp_block_kernel(r1_ref, g2_ref, bt2_ref, w1_ref, b1_ref, w2_ref, b2_ref,
                      y_ref, *, eps, compute_dtype):
    r1 = r1_ref[0]                                                 # (S, D) f32
    xn = _layernorm(r1, g2_ref[...], bt2_ref[...], eps)
    mid = jnp.dot(xn.astype(compute_dtype), w1_ref[...],
                  preferred_element_type=jnp.float32) + b1_ref[...]
    mid = _gelu_tanh(mid)
    out = jnp.dot(mid.astype(compute_dtype), w2_ref[...],
                  preferred_element_type=jnp.float32) + b2_ref[...]
    y_ref[0] = out + r1                                            # residual 2


# --------------------------------------------------------------------------
# Wrapper
# --------------------------------------------------------------------------
def block_forward(x, params, *, num_heads, compute_dtype=jnp.bfloat16, eps=1e-6):
    """x: (B, S, D) float32 hidden states (S = n_patches + 1).

    Returns (y, weights) like the PyTorch Block.forward; weights is None
    (vis=False path). Eval mode: dropout is identity.
    """
    B, S, D = x.shape
    head_dim = D // num_heads
    mlp_dim = params["w1"].shape[0]
    f32 = jnp.float32

    x = x.astype(f32)
    rel = params["rel"].astype(f32)                                # (1, S, D)

    # Fused QKV weight/bias (PyTorch Linear weight is (out, in); y = x @ W.T + b).
    w_qkv = jnp.concatenate(
        [params["wq"].T, params["wk"].T, params["wv"].T], axis=1
    ).astype(compute_dtype)                                        # (D, 3D)
    b_qkv = jnp.concatenate(
        [params["bq"], params["bk"], params["bv"]]).reshape(1, 3 * D).astype(f32)
    g1 = params["ln1_g"].reshape(1, D).astype(f32)
    bt1 = params["ln1_b"].reshape(1, D).astype(f32)
    wo_t = params["wo"].T.astype(compute_dtype)                    # (D, D)
    bo = params["bo"].reshape(1, D).astype(f32)

    seq_spec = pl.BlockSpec((1, S, D), lambda b: (b, 0, 0))

    attn_kernel = functools.partial(
        _attn_block_kernel, num_heads=num_heads, head_dim=head_dim, hidden=D,
        eps=eps, scale=1.0 / math.sqrt(head_dim), compute_dtype=compute_dtype)

    r1 = pl.pallas_call(
        attn_kernel,
        out_shape=jax.ShapeDtypeStruct((B, S, D), f32),
        grid_spec=pltpu.PrefetchScalarGridSpec(
            num_scalar_prefetch=0,
            grid=(B,),
            in_specs=[
                seq_spec,                                         # x (per batch)
                pl.BlockSpec((1, S, D), lambda b: (0, 0, 0)),     # rel (shared)
                pl.BlockSpec((1, D), lambda b: (0, 0)),           # LN1 gamma
                pl.BlockSpec((1, D), lambda b: (0, 0)),           # LN1 beta
                pl.BlockSpec((D, 3 * D), lambda b: (0, 0)),       # fused QKV W
                pl.BlockSpec((1, 3 * D), lambda b: (0, 0)),       # fused QKV b
                pl.BlockSpec((D, D), lambda b: (0, 0)),           # Wo
                pl.BlockSpec((1, D), lambda b: (0, 0)),           # bo
            ],
            out_specs=seq_spec,
        ),
        compiler_params=pltpu.CompilerParams(
            dimension_semantics=("parallel",)),
    )(x, rel, g1, bt1, w_qkv, b_qkv, wo_t, bo)

    g2 = params["ln2_g"].reshape(1, D).astype(f32)
    bt2 = params["ln2_b"].reshape(1, D).astype(f32)
    w1_t = params["w1"].T.astype(compute_dtype)                   # (D, mlp)
    b1 = params["b1"].reshape(1, mlp_dim).astype(f32)
    w2_t = params["w2"].T.astype(compute_dtype)                   # (mlp, D)
    b2 = params["b2"].reshape(1, D).astype(f32)

    mlp_kernel = functools.partial(_mlp_block_kernel, eps=eps,
                                   compute_dtype=compute_dtype)
    y = pl.pallas_call(
        mlp_kernel,
        out_shape=jax.ShapeDtypeStruct((B, S, D), f32),
        grid_spec=pltpu.PrefetchScalarGridSpec(
            num_scalar_prefetch=0,
            grid=(B,),
            in_specs=[
                seq_spec,                                         # r1 (per batch)
                pl.BlockSpec((1, D), lambda b: (0, 0)),           # LN2 gamma
                pl.BlockSpec((1, D), lambda b: (0, 0)),           # LN2 beta
                pl.BlockSpec((D, mlp_dim), lambda b: (0, 0)),     # W1
                pl.BlockSpec((1, mlp_dim), lambda b: (0, 0)),     # b1
                pl.BlockSpec((mlp_dim, D), lambda b: (0, 0)),     # W2
                pl.BlockSpec((1, D), lambda b: (0, 0)),           # b2
            ],
            out_specs=seq_spec,
        ),
        compiler_params=pltpu.CompilerParams(
            dimension_semantics=("parallel",)),
    )(r1, g2, bt2, w1_t, b1, w2_t, b2)

    # TODO(synk): training-mode Dropout (attention/proj/mlp) is identity in eval
    # and is not implemented; vis=True attention-probability output not returned.
    return y, None


# --------------------------------------------------------------------------
# Pure-JAX references mirroring the PyTorch Block.forward (eval mode).
# --------------------------------------------------------------------------
def _reference(x, params, *, num_heads, compute_dtype, eps=1e-6):
    B, S, D = x.shape
    head_dim = D // num_heads
    scale = 1.0 / math.sqrt(head_dim)

    def lin(v, w, b):
        return jnp.dot(v.astype(compute_dtype), w.T.astype(compute_dtype),
                       preferred_element_type=jnp.float32) + b

    def ln(v, g, b):
        mu = v.mean(-1, keepdims=True)
        var = ((v - mu) ** 2).mean(-1, keepdims=True)
        return (v - mu) * jax.lax.rsqrt(var + eps) * g + b

    h = x
    xn = ln(x, params["ln1_g"], params["ln1_b"])
    rel = jnp.broadcast_to(params["rel"], (B, S, D))
    q = lin(xn, params["wq"], params["bq"])
    k = lin(xn, params["wk"], params["bk"]) + rel
    v = lin(xn, params["wv"], params["bv"]) + rel

    def split(t):
        return t.reshape(B, S, num_heads, head_dim).transpose(0, 2, 1, 3)

    qh, kh, vh = split(q), split(k), split(v)
    scores = jnp.einsum("bhqd,bhkd->bhqk",
                        qh.astype(compute_dtype), kh.astype(compute_dtype),
                        preferred_element_type=jnp.float32) * scale
    probs = jax.nn.softmax(scores, axis=-1)
    ctx = jnp.einsum("bhqk,bhkd->bhqd",
                     probs.astype(compute_dtype), vh.astype(compute_dtype),
                     preferred_element_type=jnp.float32)
    ctx = ctx.transpose(0, 2, 1, 3).reshape(B, S, D)

    r1 = lin(ctx, params["wo"], params["bo"]) + h
    xn2 = ln(r1, params["ln2_g"], params["ln2_b"])
    mid = _gelu_tanh(lin(xn2, params["w1"], params["b1"]))
    return lin(mid, params["w2"], params["b2"]) + r1


if __name__ == "__main__":
    # Small config consistent with the module: img 16x16, patch 4x4 -> 16 patches,
    # seq = 17 (patches + cls), hidden = 32, heads = 4, mlp_dim = 64, batch = 2.
    B, S, D = 2, 17, 32
    num_heads = 4
    mlp_dim = 64

    key = jax.random.PRNGKey(0)
    keys = jax.random.split(key, 18)

    def nrm(k, shape, s=1.0):
        return jax.random.normal(k, shape, dtype=jnp.float32) * s

    x = nrm(keys[0], (B, S, D))
    params = {
        "ln1_g": 1.0 + nrm(keys[1], (D,), 0.05),
        "ln1_b": nrm(keys[2], (D,), 0.05),
        "wq": nrm(keys[3], (D, D), 0.08), "bq": nrm(keys[4], (D,), 0.05),
        "wk": nrm(keys[5], (D, D), 0.08), "bk": nrm(keys[6], (D,), 0.05),
        "wv": nrm(keys[7], (D, D), 0.08), "bv": nrm(keys[8], (D,), 0.05),
        "wo": nrm(keys[9], (D, D), 0.08), "bo": nrm(keys[10], (D,), 0.05),
        "rel": nrm(keys[11], (1, S, D), 0.02),
        "ln2_g": 1.0 + nrm(keys[12], (D,), 0.05),
        "ln2_b": nrm(keys[13], (D,), 0.05),
        "w1": nrm(keys[14], (mlp_dim, D), 0.08), "b1": nrm(keys[15], (mlp_dim,), 0.05),
        "w2": nrm(keys[16], (D, mlp_dim), 0.08), "b2": nrm(keys[17], (D,), 0.05),
    }

    out, weights = block_forward(x, params, num_heads=num_heads,
                                 compute_dtype=jnp.bfloat16)
    out = jax.block_until_ready(out)

    ref_bf16 = _reference(x, params, num_heads=num_heads,
                          compute_dtype=jnp.bfloat16)
    ref_f32 = _reference(x, params, num_heads=num_heads,
                         compute_dtype=jnp.float32)

    assert out.shape == (B, S, D), out.shape
    assert weights is None
    assert jnp.allclose(out, ref_bf16, atol=1e-2, rtol=1e-2), (
        "max diff vs matched-precision ref:",
        float(jnp.max(jnp.abs(out - ref_bf16))))
    assert jnp.allclose(out, ref_f32, atol=2e-1, rtol=2e-1), (
        "max diff vs f32 ref:", float(jnp.max(jnp.abs(out - ref_f32))))

    print("KERNEL_OK")
</pallas_src>

<mosaic_0001>
module attributes {stable_mosaic.version = 11 : i64} {
  func.func @_attn_block_kernel(%arg0: i32, %arg1: memref<1x17x32xf32, #tpu.memory_space<vmem>>, %arg2: memref<1x17x32xf32, #tpu.memory_space<vmem>>, %arg3: memref<1x32xf32, #tpu.memory_space<vmem>>, %arg4: memref<1x32xf32, #tpu.memory_space<vmem>>, %arg5: memref<32x96xbf16, #tpu.memory_space<vmem>>, %arg6: memref<1x96xf32, #tpu.memory_space<vmem>>, %arg7: memref<32x32xbf16, #tpu.memory_space<vmem>>, %arg8: memref<1x32xf32, #tpu.memory_space<vmem>>, %arg9: memref<1x17x32xf32, #tpu.memory_space<vmem>>) attributes {dimension_semantics = [#tpu.dimension_semantics<parallel>], iteration_bounds = array<i64: 2>, scalar_prefetch = 0 : i64, scratch_operands = 0 : i64, tpu.core_type = #tpu.core_type<tc>, window_params = [{transform_indices = @transform_0, window_bounds = array<i64: 1, 17, 32>}, {pipeline_mode = #tpu.pipeline_mode<synchronous>, transform_indices = @transform_1, window_bounds = array<i64: 1, 17, 32>}, {pipeline_mode = #tpu.pipeline_mode<synchronous>, transform_indices = @transform_2, window_bounds = array<i64: 1, 32>}, {pipeline_mode = #tpu.pipeline_mode<synchronous>, transform_indices = @transform_3, window_bounds = array<i64: 1, 32>}, {pipeline_mode = #tpu.pipeline_mode<synchronous>, transform_indices = @transform_4, window_bounds = array<i64: 32, 96>}, {pipeline_mode = #tpu.pipeline_mode<synchronous>, transform_indices = @transform_5, window_bounds = array<i64: 1, 96>}, {pipeline_mode = #tpu.pipeline_mode<synchronous>, transform_indices = @transform_6, window_bounds = array<i64: 32, 32>}, {pipeline_mode = #tpu.pipeline_mode<synchronous>, transform_indices = @transform_7, window_bounds = array<i64: 1, 32>}, {transform_indices = @transform_8, window_bounds = array<i64: 1, 17, 32>}]} {
    %c0 = arith.constant 0 : index
    %c0_0 = arith.constant 0 : index
    %c0_1 = arith.constant 0 : index
    %0 = vector.load %arg1[%c0, %c0_0, %c0_1] : memref<1x17x32xf32, #tpu.memory_space<vmem>>, vector<1x17x32xf32>
    %1 = vector.shape_cast %0 : vector<1x17x32xf32> to vector<17x32xf32>
    %c0_2 = arith.constant 0 : index
    %c0_3 = arith.constant 0 : index
    %c0_4 = arith.constant 0 : index
    %2 = vector.load %arg2[%c0_2, %c0_3, %c0_4] : memref<1x17x32xf32, #tpu.memory_space<vmem>>, vector<1x17x32xf32>
    %3 = vector.shape_cast %2 : vector<1x17x32xf32> to vector<17x32xf32>
    %c0_5 = arith.constant 0 : index
    %c0_6 = arith.constant 0 : index
    %4 = vector.load %arg3[%c0_5, %c0_6] : memref<1x32xf32, #tpu.memory_space<vmem>>, vector<1x32xf32>
    %c0_7 = arith.constant 0 : index
    %c0_8 = arith.constant 0 : index
    %5 = vector.load %arg4[%c0_7, %c0_8] : memref<1x32xf32, #tpu.memory_space<vmem>>, vector<1x32xf32>
    %cst = arith.constant dense<0.000000e+00> : vector<17xf32>
    %6 = vector.multi_reduction <add>, %1, %cst [1] : vector<17x32xf32> to vector<17xf32>
    %7 = vector.shape_cast %6 : vector<17xf32> to vector<17x1xf32>
    %cst_9 = arith.constant 3.200000e+01 : f32
    %8 = vector.broadcast %cst_9 : f32 to vector<17x1xf32>
    %9 = arith.divf %7, %8 : vector<17x1xf32>
    %10 = vector.broadcast %9 : vector<17x1xf32> to vector<17x32xf32>
    %11 = arith.subf %1, %10 : vector<17x32xf32>
    %12 = arith.mulf %11, %11 : vector<17x32xf32>
    %cst_10 = arith.constant dense<0.000000e+00> : vector<17xf32>
    %13 = vector.multi_reduction <add>, %12, %cst_10 [1] : vector<17x32xf32> to vector<17xf32>
    %14 = vector.shape_cast %13 : vector<17xf32> to vector<17x1xf32>
    %cst_11 = arith.constant 3.200000e+01 : f32
    %15 = vector.broadcast %cst_11 : f32 to vector<17x1xf32>
    %16 = arith.divf %14, %15 : vector<17x1xf32>
    %cst_12 = arith.constant 9.99999997E-7 : f32
    %17 = vector.broadcast %cst_12 : f32 to vector<17x1xf32>
    %18 = arith.addf %16, %17 : vector<17x1xf32>
    %19 = math.rsqrt %18 : vector<17x1xf32>
    %20 = vector.broadcast %19 : vector<17x1xf32> to vector<17x32xf32>
    %21 = arith.mulf %11, %20 : vector<17x32xf32>
    %22 = vector.broadcast %4 : vector<1x32xf32> to vector<17x32xf32>
    %23 = arith.mulf %21, %22 : vector<17x32xf32>
    %24 = vector.broadcast %5 : vector<1x32xf32> to vector<17x32xf32>
    %25 = arith.addf %23, %24 : vector<17x32xf32>
    %26 = arith.truncf %25 : vector<17x32xf32> to vector<17x32xbf16>
    %c0_13 = arith.constant 0 : index
    %c0_14 = arith.constant 0 : index
    %27 = vector.load %arg5[%c0_13, %c0_14] : memref<32x96xbf16, #tpu.memory_space<vmem>>, vector<32x96xbf16>
    %cst_15 = arith.constant dense<0.000000e+00> : vector<17x96xf32>
    %28 = tpu.matmul %26, %27, %cst_15 {dimension_numbers = #tpu.dot_dimension_numbers<[1], [0], [0], [1], [0, 0, 1, 1], [], []>} : vector<17x32xbf16>, vector<32x96xbf16>, vector<17x96xf32> -> vector<17x96xf32>
    %c0_16 = arith.constant 0 : index
    %c0_17 = arith.constant 0 : index
    %29 = vector.load %arg6[%c0_16, %c0_17] : memref<1x96xf32, #tpu.memory_space<vmem>>, vector<1x96xf32>
    %30 = vector.broadcast %29 : vector<1x96xf32> to vector<17x96xf32>
    %31 = arith.addf %28, %30 : vector<17x96xf32>
    %32 = vector.extract_strided_slice %31 {offsets = [0, 0], sizes = [17, 32], strides = [1, 1]} : vector<17x96xf32> to vector<17x32xf32>
    %33 = vector.extract_strided_slice %31 {offsets = [0, 32], sizes = [17, 32], strides = [1, 1]} : vector<17x96xf32> to vector<17x32xf32>
    %34 = arith.addf %33, %3 : vector<17x32xf32>
    %35 = vector.extract_strided_slice %31 {offsets = [0, 64], sizes = [17, 32], strides = [1, 1]} : vector<17x96xf32> to vector<17x32xf32>
    %36 = arith.addf %35, %3 : vector<17x32xf32>
    %37 = vector.extract_strided_slice %32 {offsets = [0, 0], sizes = [17, 8], strides = [1, 1]} : vector<17x32xf32> to vector<17x8xf32>
    %38 = arith.truncf %37 : vector<17x8xf32> to vector<17x8xbf16>
    %39 = vector.extract_strided_slice %34 {offsets = [0, 0], sizes = [17, 8], strides = [1, 1]} : vector<17x32xf32> to vector<17x8xf32>
    %40 = arith.truncf %39 : vector<17x8xf32> to vector<17x8xbf16>
    %41 = vector.extract_strided_slice %36 {offsets = [0, 0], sizes = [17, 8], strides = [1, 1]} : vector<17x32xf32> to vector<17x8xf32>
    %42 = arith.truncf %41 : vector<17x8xf32> to vector<17x8xbf16>
    "tpu.trace_start"() <{level = 10 : i32, message = "qd,kd->qk"}> : () -> ()
    %cst_18 = arith.constant dense<0.000000e+00> : vector<17x17xf32>
    %43 = tpu.matmul %38, %40, %cst_18 {dimension_numbers = #tpu.dot_dimension_numbers<[1], [1], [0], [0], [0, 0, 1, 0], [], []>} : vector<17x8xbf16>, vector<17x8xbf16>, vector<17x17xf32> -> vector<17x17xf32>
    "tpu.trace_stop"() : () -> ()
    %cst_19 = arith.constant 0.353553385 : f32
    %44 = vector.broadcast %cst_19 : f32 to vector<17x17xf32>
    %45 = arith.mulf %43, %44 : vector<17x17xf32>
    %cst_20 = arith.constant dense<0xFF800000> : vector<17xf32>
    %46 = vector.multi_reduction <maximumf>, %45, %cst_20 [1] : vector<17x17xf32> to vector<17xf32>
    %47 = vector.shape_cast %46 : vector<17xf32> to vector<17x1xf32>
    %48 = vector.broadcast %47 : vector<17x1xf32> to vector<17x17xf32>
    %49 = arith.subf %45, %48 : vector<17x17xf32>
    %50 = math.exp %49 : vector<17x17xf32>
    %cst_21 = arith.constant dense<0.000000e+00> : vector<17xf32>
    %51 = vector.multi_reduction <add>, %50, %cst_21 [1] : vector<17x17xf32> to vector<17xf32>
    %52 = vector.shape_cast %51 : vector<17xf32> to vector<17x1xf32>
    %53 = vector.broadcast %52 : vector<17x1xf32> to vector<17x17xf32>
    %54 = arith.divf %50, %53 : vector<17x17xf32>
    %55 = arith.truncf %54 : vector<17x17xf32> to vector<17x17xbf16>
    %cst_22 = arith.constant dense<0.000000e+00> : vector<17x8xf32>
    %56 = tpu.matmul %55, %42, %cst_22 {dimension_numbers = #tpu.dot_dimension_numbers<[1], [0], [0], [1], [0, 0, 1, 1], [], []>} : vector<17x17xbf16>, vector<17x8xbf16>, vector<17x8xf32> -> vector<17x8xf32>
    %57 = vector.extract_strided_slice %32 {offsets = [0, 8], sizes = [17, 8], strides = [1, 1]} : vector<17x32xf32> to vector<17x8xf32>
    %58 = arith.truncf %57 : vector<17x8xf32> to vector<17x8xbf16>
    %59 = vector.extract_strided_slice %34 {offsets = [0, 8], sizes = [17, 8], strides = [1, 1]} : vector<17x32xf32> to vector<17x8xf32>
    %60 = arith.truncf %59 : vector<17x8xf32> to vector<17x8xbf16>
    %61 = vector.extract_strided_slice %36 {offsets = [0, 8], sizes = [17, 8], strides = [1, 1]} : vector<17x32xf32> to vector<17x8xf32>
    %62 = arith.truncf %61 : vector<17x8xf32> to vector<17x8xbf16>
    "tpu.trace_start"() <{level = 10 : i32, message = "qd,kd->qk"}> : () -> ()
    %cst_23 = arith.constant dense<0.000000e+00> : vector<17x17xf32>
    %63 = tpu.matmul %58, %60, %cst_23 {dimension_numbers = #tpu.dot_dimension_numbers<[1], [1], [0], [0], [0, 0, 1, 0], [], []>} : vector<17x8xbf16>, vector<17x8xbf16>, vector<17x17xf32> -> vector<17x17xf32>
    "tpu.trace_stop"() : () -> ()
    %cst_24 = arith.constant 0.353553385 : f32
    %64 = vector.broadcast %cst_24 : f32 to vector<17x17xf32>
    %65 = arith.mulf %63, %64 : vector<17x17xf32>
    %cst_25 = arith.constant dense<0xFF800000> : vector<17xf32>
    %66 = vector.multi_reduction <maximumf>, %65, %cst_25 [1] : vector<17x17xf32> to vector<17xf32>
    %67 = vector.shape_cast %66 : vector<17xf32> to vector<17x1xf32>
    %68 = vector.broadcast %67 : vector<17x1xf32> to vector<17x17xf32>
    %69 = arith.subf %65, %68 : vector<17x17xf32>
    %70 = math.exp %69 : vector<17x17xf32>
    %cst_26 = arith.constant dense<0.000000e+00> : vector<17xf32>
    %71 = vector.multi_reduction <add>, %70, %cst_26 [1] : vector<17x17xf32> to vector<17xf32>
    %72 = vector.shape_cast %71 : vector<17xf32> to vector<17x1xf32>
    %73 = vector.broadcast %72 : vector<17x1xf32> to vector<17x17xf32>
    %74 = arith.divf %70, %73 : vector<17x17xf32>
    %75 = arith.truncf %74 : vector<17x17xf32> to vector<17x17xbf16>
    %cst_27 = arith.constant dense<0.000000e+00> : vector<17x8xf32>
    %76 = tpu.matmul %75, %62, %cst_27 {dimension_numbers = #tpu.dot_dimension_numbers<[1], [0], [0], [1], [0, 0, 1, 1], [], []>} : vector<17x17xbf16>, vector<17x8xbf16>, vector<17x8xf32> -> vector<17x8xf32>
    %77 = vector.extract_strided_slice %32 {offsets = [0, 16], sizes = [17, 8], strides = [1, 1]} : vector<17x32xf32> to vector<17x8xf32>
    %78 = arith.truncf %77 : vector<17x8xf32> to vector<17x8xbf16>
    %79 = vector.extract_strided_slice %34 {offsets = [0, 16], sizes = [17, 8], strides = [1, 1]} : vector<17x32xf32> to vector<17x8xf32>
    %80 = arith.truncf %79 : vector<17x8xf32> to vector<17x8xbf16>
    %81 = vector.extract_strided_slice %36 {offsets = [0, 16], sizes = [17, 8], strides = [1, 1]} : vector<17x32xf32> to vector<17x8xf32>
    %82 = arith.truncf %81 : vector<17x8xf32> to vector<17x8xbf16>
    "tpu.trace_start"() <{level = 10 : i32, message = "qd,kd->qk"}> : () -> ()
    %cst_28 = arith.constant dense<0.000000e+00> : vector<17x17xf32>
    %83 = tpu.matmul %78, %80, %cst_28 {dimension_numbers = #tpu.dot_dimension_numbers<[1], [1], [0], [0], [0, 0, 1, 0], [], []>} : vector<17x8xbf16>, vector<17x8xbf16>, vector<17x17xf32> -> vector<17x17xf32>
    "tpu.trace_stop"() : () -> ()
    %cst_29 = arith.constant 0.353553385 : f32
    %84 = vector.broadcast %cst_29 : f32 to vector<17x17xf32>
    %85 = arith.mulf %83, %84 : vector<17x17xf32>
    %cst_30 = arith.constant dense<0xFF800000> : vector<17xf32>
    %86 = vector.multi_reduction <maximumf>, %85, %cst_30 [1] : vector<17x17xf32> to vector<17xf32>
    %87 = vector.shape_cast %86 : vector<17xf32> to vector<17x1xf32>
    %88 = vector.broadcast %87 : vector<17x1xf32> to vector<17x17xf32>
    %89 = arith.subf %85, %88 : vector<17x17xf32>
    %90 = math.exp %89 : vector<17x17xf32>
    %cst_31 = arith.constant dense<0.000000e+00> : vector<17xf32>
    %91 = vector.multi_reduction <add>, %90, %cst_31 [1] : vector<17x17xf32> to vector<17xf32>
    %92 = vector.shape_cast %91 : vector<17xf32> to vector<17x1xf32>
    %93 = vector.broadcast %92 : vector<17x1xf32> to vector<17x17xf32>
    %94 = arith.divf %90, %93 : vector<17x17xf32>
    %95 = arith.truncf %94 : vector<17x17xf32> to vector<17x17xbf16>
    %cst_32 = arith.constant dense<0.000000e+00> : vector<17x8xf32>
    %96 = tpu.matmul %95, %82, %cst_32 {dimension_numbers = #tpu.dot_dimension_numbers<[1], [0], [0], [1], [0, 0, 1, 1], [], []>} : vector<17x17xbf16>, vector<17x8xbf16>, vector<17x8xf32> -> vector<17x8xf32>
    %97 = vector.extract_strided_slice %32 {offsets = [0, 24], sizes = [17, 8], strides = [1, 1]} : vector<17x32xf32> to vector<17x8xf32>
    %98 = arith.truncf %97 : vector<17x8xf32> to vector<17x8xbf16>
    %99 = vector.extract_strided_slice %34 {offsets = [0, 24], sizes = [17, 8], strides = [1, 1]} : vector<17x32xf32> to vector<17x8xf32>
    %100 = arith.truncf %99 : vector<17x8xf32> to vector<17x8xbf16>
    %101 = vector.extract_strided_slice %36 {offsets = [0, 24], sizes = [17, 8], strides = [1, 1]} : vector<17x32xf32> to vector<17x8xf32>
    %102 = arith.truncf %101 : vector<17x8xf32> to vector<17x8xbf16>
    "tpu.trace_start"() <{level = 10 : i32, message = "qd,kd->qk"}> : () -> ()
    %cst_33 = arith.constant dense<0.000000e+00> : vector<17x17xf32>
    %103 = tpu.matmul %98, %100, %cst_33 {dimension_numbers = #tpu.dot_dimension_numbers<[1], [1], [0], [0], [0, 0, 1, 0], [], []>} : vector<17x8xbf16>, vector<17x8xbf16>, vector<17x17xf32> -> vector<17x17xf32>
    "tpu.trace_stop"() : () -> ()
    %cst_34 = arith.constant 0.353553385 : f32
    %104 = vector.broadcast %cst_34 : f32 to vector<17x17xf32>
    %105 = arith.mulf %103, %104 : vector<17x17xf32>
    %cst_35 = arith.constant dense<0xFF800000> : vector<17xf32>
    %106 = vector.multi_reduction <maximumf>, %105, %cst_35 [1] : vector<17x17xf32> to vector<17xf32>
    %107 = vector.shape_cast %106 : vector<17xf32> to vector<17x1xf32>
    %108 = vector.broadcast %107 : vector<17x1xf32> to vector<17x17xf32>
    %109 = arith.subf %105, %108 : vector<17x17xf32>
    %110 = math.exp %109 : vector<17x17xf32>
    %cst_36 = arith.constant dense<0.000000e+00> : vector<17xf32>
    %111 = vector.multi_reduction <add>, %110, %cst_36 [1] : vector<17x17xf32> to vector<17xf32>
    %112 = vector.shape_cast %111 : vector<17xf32> to vector<17x1xf32>
    %113 = vector.broadcast %112 : vector<17x1xf32> to vector<17x17xf32>
    %114 = arith.divf %110, %113 : vector<17x17xf32>
    %115 = arith.truncf %114 : vector<17x17xf32> to vector<17x17xbf16>
    %cst_37 = arith.constant dense<0.000000e+00> : vector<17x8xf32>
    %116 = tpu.matmul %115, %102, %cst_37 {dimension_numbers = #tpu.dot_dimension_numbers<[1], [0], [0], [1], [0, 0, 1, 1], [], []>} : vector<17x17xbf16>, vector<17x8xbf16>, vector<17x8xf32> -> vector<17x8xf32>
    %117 = tpu.concatenate %56, %76, %96, %116 in 1 : vector<17x8xf32>, vector<17x8xf32>, vector<17x8xf32>, vector<17x8xf32> -> vector<17x32xf32>
    %118 = arith.truncf %117 : vector<17x32xf32> to vector<17x32xbf16>
    %c0_38 = arith.constant 0 : index
    %c0_39 = arith.constant 0 : index
    %119 = vector.load %arg7[%c0_38, %c0_39] : memref<32x32xbf16, #tpu.memory_space<vmem>>, vector<32x32xbf16>
    %cst_40 = arith.constant dense<0.000000e+00> : vector<17x32xf32>
    %120 = tpu.matmul %118, %119, %cst_40 {dimension_numbers = #tpu.dot_dimension_numbers<[1], [0], [0], [1], [0, 0, 1, 1], [], []>} : vector<17x32xbf16>, vector<32x32xbf16>, vector<17x32xf32> -> vector<17x32xf32>
    %c0_41 = arith.constant 0 : index
    %c0_42 = arith.constant 0 : index
    %121 = vector.load %arg8[%c0_41, %c0_42] : memref<1x32xf32, #tpu.memory_space<vmem>>, vector<1x32xf32>
    %122 = vector.broadcast %121 : vector<1x32xf32> to vector<17x32xf32>
    %123 = arith.addf %120, %122 : vector<17x32xf32>
    %124 = arith.addf %123, %1 : vector<17x32xf32>
    %c0_43 = arith.constant 0 : index
    %c0_44 = arith.constant 0 : index
    %c0_45 = arith.constant 0 : index
    %125 = vector.load %arg9[%c0_43, %c0_44, %c0_45] : memref<1x17x32xf32, #tpu.memory_space<vmem>>, vector<1x17x32xf32>
    %126 = vector.shape_cast %125 : vector<1x17x32xf32> to vector<17x32xf32>
    %127 = vector.shape_cast %124 : vector<17x32xf32> to vector<1x17x32xf32>
    tpu.vector_store %arg9[%c0_43, %c0_44, %c0_45], %127 {strides = array<i32>} : memref<1x17x32xf32, #tpu.memory_space<vmem>>, vector<1x17x32xf32>,
    return
  }
  func.func @transform_0(%arg0: i32) -> (i32, i32, i32) {
    %c0_i32 = arith.constant 0 : i32
    %c0_i32_0 = arith.constant 0 : i32
    %c0_i32_1 = arith.constant 0 : i32
    return %arg0, %c0_i32, %c0_i32_0 : i32, i32, i32
  }
  func.func @transform_1(%arg0: i32) -> (i32, i32, i32) {
    %c0_i32 = arith.constant 0 : i32
    %c0_i32_0 = arith.constant 0 : i32
    %c0_i32_1 = arith.constant 0 : i32
    %c0_i32_2 = arith.constant 0 : i32
    return %c0_i32, %c0_i32_0, %c0_i32_1 : i32, i32, i32
  }
  func.func @transform_2(%arg0: i32) -> (i32, i32) {
    %c0_i32 = arith.constant 0 : i32
    %c0_i32_0 = arith.constant 0 : i32
    %c0_i32_1 = arith.constant 0 : i32
    return %c0_i32, %c0_i32_0 : i32, i32
  }
  func.func @transform_3(%arg0: i32) -> (i32, i32) {
    %c0_i32 = arith.constant 0 : i32
    %c0_i32_0 = arith.constant 0 : i32
    %c0_i32_1 = arith.constant 0 : i32
    return %c0_i32, %c0_i32_0 : i32, i32
  }
  func.func @transform_4(%arg0: i32) -> (i32, i32) {
    %c0_i32 = arith.constant 0 : i32
    %c0_i32_0 = arith.constant 0 : i32
    %c0_i32_1 = arith.constant 0 : i32
    return %c0_i32, %c0_i32_0 : i32, i32
  }
  func.func @transform_5(%arg0: i32) -> (i32, i32) {
    %c0_i32 = arith.constant 0 : i32
    %c0_i32_0 = arith.constant 0 : i32
    %c0_i32_1 = arith.constant 0 : i32
    return %c0_i32, %c0_i32_0 : i32, i32
  }
  func.func @transform_6(%arg0: i32) -> (i32, i32) {
    %c0_i32 = arith.constant 0 : i32
    %c0_i32_0 = arith.constant 0 : i32
    %c0_i32_1 = arith.constant 0 : i32
    return %c0_i32, %c0_i32_0 : i32, i32
  }
  func.func @transform_7(%arg0: i32) -> (i32, i32) {
    %c0_i32 = arith.constant 0 : i32
    %c0_i32_0 = arith.constant 0 : i32
    %c0_i32_1 = arith.constant 0 : i32
    return %c0_i32, %c0_i32_0 : i32, i32
  }
  func.func @transform_8(%arg0: i32) -> (i32, i32, i32) {
    %c0_i32 = arith.constant 0 : i32
    %c0_i32_0 = arith.constant 0 : i32
    %c0_i32_1 = arith.constant 0 : i32
    return %arg0, %c0_i32, %c0_i32_0 : i32, i32, i32
  }
}

</mosaic_0001>

<llo_original>
// kernel: tpu_custom_call.1
$region0: #{tpu_custom_call.1}
  #allocation0 [shape = 'u32[]', space=smem, size = 0x4, offset = 0x4, fixed_abs, tag = 'smem constant byte address 0x4 - core index']
  #allocation1 [shape = 'u32[144,128]{1,0:T(1,128)}', space=vmem, size = 0x12000, scoped, tag = 'internal scratch']
  %s0 = inlined_call_operand.vmem [shape: f32[2,17,32], index: 0, kind: input, shape index: {}]
  %s1 = inlined_call_operand.vmem [shape: f32[1,17,32], index: 1, kind: input, shape index: {}]
  %s2 = inlined_call_operand.vmem [shape: f32[1,32], index: 2, kind: input, shape index: {}]
  %s3 = inlined_call_operand.vmem [shape: f32[1,32], index: 3, kind: input, shape index: {}]
  %s4 = inlined_call_operand.vmem [shape: bf16[32,96], index: 4, kind: input, shape index: {}]
  %s5 = inlined_call_operand.vmem [shape: f32[1,96], index: 5, kind: input, shape index: {}]
  %s6 = inlined_call_operand.vmem [shape: bf16[32,32], index: 6, kind: input, shape index: {}]
  %s7 = inlined_call_operand.vmem [shape: f32[1,32], index: 7, kind: input, shape index: {}]
  %s8 = inlined_call_operand.vmem [shape: f32[2,17,32], index: 8, kind: output, shape index: {}]
  %s9 = sld [smem:[#allocation0]]
  $region65: #{tpu_custom_call.1} parent=0
    _
  %s11 = ssub.s32 1, %s9
  %s12 = scalar_select 0, %s11, %s9
  loop: start=0, step=1, limit=4
  $region2: #{tpu_custom_call.1} parent=0 // loop_pre_header
    _
  $region3: #{tpu_custom_call.1} parent=0 // loop_header
    %s14 = sphi 0, %s18
    %p15 = scmp.ge.s32.totalorder %s14, 4
    %s24 = sphi 0, %s26
    %s27 = sphi 0, %s24
    %s28 = sphi 0, %s27
    %s44 = sphi 0, %s28
    %s48 = sphi 0, %s48
    %s50 = sphi 0, %s48
    %s51 = sphi 0, %s50
    %s65 = sphi 0, %s51
    %s69 = sphi 0, %s69
    %s71 = sphi 0, %s69
    %s72 = sphi 0, %s71
    %s86 = sphi 0, %s72
    %s90 = sphi 0, %s90
    %s92 = sphi 0, %s90
    %s93 = sphi 0, %s92
    %s107 = sphi 0, %s93
    %s111 = sphi 0, %s111
    %s113 = sphi 0, %s111
    %s114 = sphi 0, %s113
    %s128 = sphi 0, %s114
    %s132 = sphi 0, %s132
    %s134 = sphi 0, %s132
    %s135 = sphi 0, %s134
    %s149 = sphi 0, %s135
    %s153 = sphi 0, %s153
    %s155 = sphi 0, %s153
    %s156 = sphi 0, %s155
    %s170 = sphi 0, %s156
    %s174 = sphi 0, %s174
    %s176 = sphi 0, %s174
    %s177 = sphi 0, %s176
    %s191 = sphi 0, %s177
    %s197 = sphi 0, %s199
    %s200 = sphi 0, %s197
    %s201 = sphi 0, %s200
    %s217 = sphi 0, %s201
  $region4: #{tpu_custom_call.1} parent=0 // loop_header_branch
    %17 = sbr.rel (%p15) target = $region8
  $region5: #{tpu_custom_call.1} parent=0 // loop_body
    %s19 = ssub.s32 %s14, 1
    %s20 = ssub.s32 %s14, 2
    %s21 = sadd.s32 %s14, 1
    %s22 = ssub.s32 %s14, %s21
    %p23 = scmp.eq.s32.totalorder %s22, 0
    %s25 = sadd.s32 %s24, 1
    %s26 = scalar_select %p23, %s24, %s25
    %p29 = pneg %p23
    %p30 = scmp.eq.s32.totalorder %s14, 1
    %p31 = por %p29, %p30
    %p32 = scmp.ne.s32.totalorder %s24, %s27
    %p33 = scmp.eq.s32.totalorder %s14, 0
    %p34 = por %p32, %p33
    %p35 = scmp.ne.s32.totalorder %s24, %s27
    %p36 = scmp.eq.s32.totalorder %s19, 1
    %p37 = por %p35, %p36
    %p38 = scmp.ne.s32.totalorder %s27, %s28
    %p39 = scmp.eq.s32.totalorder %s19, 0
    %p40 = por %p38, %p39
    %p41 = scmp.ne.s32.totalorder %s27, %s28
    %p42 = scmp.eq.s32.totalorder %s20, 1
    %p43 = por %p41, %p42
    %p45 = scmp.ne.s32.totalorder %s28, %s44
    %p46 = scmp.eq.s32.totalorder %s20, 0
    %p47 = por %p45, %p46
    %s49 = sadd.s32 %s48, 1
    %p52 = scmp.eq.s32.totalorder %s14, 1
    %p53 = scmp.ne.s32.totalorder %s48, %s50
    %p54 = scmp.eq.s32.totalorder %s14, 0
    %p55 = por %p53, %p54
    %p56 = scmp.ne.s32.totalorder %s48, %s50
    %p57 = scmp.eq.s32.totalorder %s19, 1
    %p58 = por %p56, %p57
    %p59 = scmp.ne.s32.totalorder %s50, %s51
    %p60 = scmp.eq.s32.totalorder %s19, 0
    %p61 = por %p59, %p60
    %p62 = scmp.ne.s32.totalorder %s50, %s51
    %p63 = scmp.eq.s32.totalorder %s20, 1
    %p64 = por %p62, %p63
    %p66 = scmp.ne.s32.totalorder %s51, %s65
    %p67 = scmp.eq.s32.totalorder %s20, 0
    %p68 = por %p66, %p67
    %s70 = sadd.s32 %s69, 1
    %p73 = scmp.eq.s32.totalorder %s14, 1
    %p74 = scmp.ne.s32.totalorder %s69, %s71
    %p75 = scmp.eq.s32.totalorder %s14, 0
    %p76 = por %p74, %p75
    %p77 = scmp.ne.s32.totalorder %s69, %s71
    %p78 = scmp.eq.s32.totalorder %s19, 1
    %p79 = por %p77, %p78
    %p80 = scmp.ne.s32.totalorder %s71, %s72
    %p81 = scmp.eq.s32.totalorder %s19, 0
    %p82 = por %p80, %p81
    %p83 = scmp.ne.s32.totalorder %s71, %s72
    %p84 = scmp.eq.s32.totalorder %s20, 1
    %p85 = por %p83, %p84
    %p87 = scmp.ne.s32.totalorder %s72, %s86
    %p88 = scmp.eq.s32.totalorder %s20, 0
    %p89 = por %p87, %p88
    %s91 = sadd.s32 %s90, 1
    %p94 = scmp.eq.s32.totalorder %s14, 1
    %p95 = scmp.ne.s32.totalorder %s90, %s92
    %p96 = scmp.eq.s32.totalorder %s14, 0
    %p97 = por %p95, %p96
    %p98 = scmp.ne.s32.totalorder %s90, %s92
    %p99 = scmp.eq.s32.totalorder %s19, 1
    %p100 = por %p98, %p99
    %p101 = scmp.ne.s32.totalorder %s92, %s93
    %p102 = scmp.eq.s32.totalorder %s19, 0
    %p103 = por %p101, %p102
    %p104 = scmp.ne.s32.totalorder %s92, %s93
    %p105 = scmp.eq.s32.totalorder %s20, 1
    %p106 = por %p104, %p105
    %p108 = scmp.ne.s32.totalorder %s93, %s107
    %p109 = scmp.eq.s32.totalorder %s20, 0
    %p110 = por %p108, %p109
    %s112 = sadd.s32 %s111, 1
    %p115 = scmp.eq.s32.totalorder %s14, 1
    %p116 = scmp.ne.s32.totalorder %s111, %s113
    %p117 = scmp.eq.s32.totalorder %s14, 0
    %p118 = por %p116, %p117
    %p119 = scmp.ne.s32.totalorder %s111, %s113
    %p120 = scmp.eq.s32.totalorder %s19, 1
    %p121 = por %p119, %p120
    %p122 = scmp.ne.s32.totalorder %s113, %s114
    %p123 = scmp.eq.s32.totalorder %s19, 0
    %p124 = por %p122, %p123
    %p125 = scmp.ne.s32.totalorder %s113, %s114
    %p126 = scmp.eq.s32.totalorder %s20, 1
    %p127 = por %p125, %p126
    %p129 = scmp.ne.s32.totalorder %s114, %s128
    %p130 = scmp.eq.s32.totalorder %s20, 0
    %p131 = por %p129, %p130
    %s133 = sadd.s32 %s132, 1
    %p136 = scmp.eq.s32.totalorder %s14, 1
    %p137 = scmp.ne.s32.totalorder %s132, %s134
    %p138 = scmp.eq.s32.totalorder %s14, 0
    %p139 = por %p137, %p138
    %p140 = scmp.ne.s32.totalorder %s132, %s134
    %p141 = scmp.eq.s32.totalorder %s19, 1
    %p142 = por %p140, %p141
    %p143 = scmp.ne.s32.totalorder %s134, %s135
    %p144 = scmp.eq.s32.totalorder %s19, 0
    %p145 = por %p143, %p144
    %p146 = scmp.ne.s32.totalorder %s134, %s135
    %p147 = scmp.eq.s32.totalorder %s20, 1
    %p148 = por %p146, %p147
    %p150 = scmp.ne.s32.totalorder %s135, %s149
    %p151 = scmp.eq.s32.totalorder %s20, 0
    %p152 = por %p150, %p151
    %s154 = sadd.s32 %s153, 1
    %p157 = scmp.eq.s32.totalorder %s14, 1
    %p158 = scmp.ne.s32.totalorder %s153, %s155
    %p159 = scmp.eq.s32.totalorder %s14, 0
    %p160 = por %p158, %p159
    %p161 = scmp.ne.s32.totalorder %s153, %s155
    %p162 = scmp.eq.s32.totalorder %s19, 1
    %p163 = por %p161, %p162
    %p164 = scmp.ne.s32.totalorder %s155, %s156
    %p165 = scmp.eq.s32.totalorder %s19, 0
    %p166 = por %p164, %p165
    %p167 = scmp.ne.s32.totalorder %s155, %s156
    %p168 = scmp.eq.s32.totalorder %s20, 1
    %p169 = por %p167, %p168
    %p171 = scmp.ne.s32.totalorder %s156, %s170
    %p172 = scmp.eq.s32.totalorder %s20, 0
    %p173 = por %p171, %p172
    %s175 = sadd.s32 %s174, 1
    %p178 = scmp.eq.s32.totalorder %s14, 1
    %p179 = scmp.ne.s32.totalorder %s174, %s176
    %p180 = scmp.eq.s32.totalorder %s14, 0
    %p181 = por %p179, %p180
    %p182 = scmp.ne.s32.totalorder %s174, %s176
    %p183 = scmp.eq.s32.totalorder %s19, 1
    %p184 = por %p182, %p183
    %p185 = scmp.ne.s32.totalorder %s176, %s177
    %p186 = scmp.eq.s32.totalorder %s19, 0
    %p187 = por %p185, %p186
    %p188 = scmp.ne.s32.totalorder %s176, %s177
    %p189 = scmp.eq.s32.totalorder %s20, 1
    %p190 = por %p188, %p189
    %p192 = scmp.ne.s32.totalorder %s177, %s191
    %p193 = scmp.eq.s32.totalorder %s20, 0
    %p194 = por %p192, %p193
    %s195 = ssub.s32 %s14, %s21
    %p196 = scmp.eq.s32.totalorder %s195, 0
    %s198 = sadd.s32 %s197, 1
    %s199 = scalar_select %p196, %s197, %s198
    %p202 = pneg %p196
    %p203 = scmp.eq.s32.totalorder %s14, 1
    %p204 = por %p202, %p203
    %p205 = scmp.ne.s32.totalorder %s197, %s200
    %p206 = scmp.eq.s32.totalorder %s14, 0
    %p207 = por %p205, %p206
    %p208 = scmp.ne.s32.totalorder %s197, %s200
    %p209 = scmp.eq.s32.totalorder %s19, 1
    %p210 = por %p208, %p209
    %p211 = scmp.ne.s32.totalorder %s200, %s201
    %p212 = scmp.eq.s32.totalorder %s19, 0
    %p213 = por %p211, %p212
    %p214 = scmp.ne.s32.totalorder %s200, %s201
    %p215 = scmp.eq.s32.totalorder %s20, 1
    %p216 = por %p214, %p215
    %p218 = scmp.ne.s32.totalorder %s201, %s217
    %p219 = scmp.eq.s32.totalorder %s20, 0
    %p220 = por %p218, %p219
    %p221 = scmp.le.s32.totalorder 1, %s14
    %p222 = scmp.lt.s32.totalorder %s14, 3
    %p223 = pnand %p221, %p222
    %p224 = pneg %p223
    // Predicated region
    $region9: #{tpu_custom_call.1} parent=5 // pred_check
      _
    $region10: #{tpu_custom_call.1} parent=5 // pred_check_branch
      %226 = sbr.rel (%p223) target = $region12
    $region11: #{tpu_custom_call.1} parent=5 // pred_region
      %s227 = ssub.s32 %s14, 1
      // Predicated region
      $region13: #{tpu_custom_call.1} parent=11 // pred_check
        %p228 = pneg %p61
      $region14: #{tpu_custom_call.1} parent=11 // pred_check_branch
        %230 = sbr.rel (%p228) target = $region16
      $region15: #{tpu_custom_call.1} parent=11 // pred_region
        _
      $region16: #{tpu_custom_call.1} parent=11 // pred_fallthru
        _
      // Predicated region
      $region17: #{tpu_custom_call.1} parent=11 // pred_check
        %p231 = pneg %p82
      $region18: #{tpu_custom_call.1} parent=11 // pred_check_branch
        %233 = sbr.rel (%p231) target = $region20
      $region19: #{tpu_custom_call.1} parent=11 // pred_region
        _
      $region20: #{tpu_custom_call.1} parent=11 // pred_fallthru
        _
      // Predicated region
      $region21: #{tpu_custom_call.1} parent=11 // pred_check
        %p234 = pneg %p103
      $region22: #{tpu_custom_call.1} parent=11 // pred_check_branch
        %236 = sbr.rel (%p234) target = $region24
      $region23: #{tpu_custom_call.1} parent=11 // pred_region
        _
      $region24: #{tpu_custom_call.1} parent=11 // pred_fallthru
        _
      // Predicated region
      $region25: #{tpu_custom_call.1} parent=11 // pred_check
        %p237 = pneg %p124
      $region26: #{tpu_custom_call.1} parent=11 // pred_check_branch
        %239 = sbr.rel (%p237) target = $region28
      $region27: #{tpu_custom_call.1} parent=11 // pred_region
        _
      $region28: #{tpu_custom_call.1} parent=11 // pred_fallthru
        _
      // Predicated region
      $region29: #{tpu_custom_call.1} parent=11 // pred_check
        %p240 = pneg %p145
      $region30: #{tpu_custom_call.1} parent=11 // pred_check_branch
        %242 = sbr.rel (%p240) target = $region32
      $region31: #{tpu_custom_call.1} parent=11 // pred_region
        _
      $region32: #{tpu_custom_call.1} parent=11 // pred_fallthru
        _
      // Predicated region
      $region33: #{tpu_custom_call.1} parent=11 // pred_check
        %p243 = pneg %p166
      $region34: #{tpu_custom_call.1} parent=11 // pred_check_branch
        %245 = sbr.rel (%p243) target = $region36
      $region35: #{tpu_custom_call.1} parent=11 // pred_region
        _
      $region36: #{tpu_custom_call.1} parent=11 // pred_fallthru
        _
      // Predicated region
      $region37: #{tpu_custom_call.1} parent=11 // pred_check
        %p246 = pneg %p187
      $region38: #{tpu_custom_call.1} parent=11 // pred_check_branch
        %248 = sbr.rel (%p246) target = $region40
      $region39: #{tpu_custom_call.1} parent=11 // pred_region
        _
      $region40: #{tpu_custom_call.1} parent=11 // pred_fallthru
        _
    $region12: #{tpu_custom_call.1} parent=5 // pred_fallthru
      _
    %p249 = scmp.lt.s32.totalorder %s14, 2
    // Predicated region
    $region41: #{tpu_custom_call.1} parent=5 // pred_check
      %p250 = pneg %p249
    $region42: #{tpu_custom_call.1} parent=5 // pred_check_branch
      %252 = sbr.rel (%p250) target = $region44
    $region43: #{tpu_custom_call.1} parent=5 // pred_region
      // Predicated region
      $region45: #{tpu_custom_call.1} parent=43 // pred_check
        %p253 = pneg %p34
      $region46: #{tpu_custom_call.1} parent=43 // pred_check_branch
        %255 = sbr.rel (%p253) target = $region48
      $region47: #{tpu_custom_call.1} parent=43 // pred_region
        %p256 = scmp.lt.s32.totalorder %s14, 1
        %s257 = scalar_select %p256, %s14, 1
        %s258 = smul.addr %s257, 3
        %s259 = smul.addr %s258, 8
        %s260 = scalar_lea.vmem %s0, %s259
      $region48: #{tpu_custom_call.1} parent=43 // pred_fallthru
        _
    $region44: #{tpu_custom_call.1} parent=5 // pred_fallthru
      _
    %p261 = scmp.le.s32.totalorder 1, %s14
    %p262 = scmp.lt.s32.totalorder %s14, 3
    %p263 = pnand %p261, %p262
    %p264 = pneg %p263
    // Predicated region
    $region49: #{tpu_custom_call.1} parent=5 // pred_check
      _
    $region50: #{tpu_custom_call.1} parent=5 // pred_check_branch
      %266 = sbr.rel (%p263) target = $region52
    $region51: #{tpu_custom_call.1} parent=5 // pred_region
      %s267 = ssub.s32 %s14, 1
      %p268 = scmp.lt.s32.totalorder %s19, 1
      %s269 = scalar_select %p268, %s19, 1
      %s270 = smul.addr %s269, 3
      %s271 = smul.addr %s270, 8
      %s272 = scalar_lea.vmem %s0, %s271
      %p273 = pneg %p40
      %p274 = pneg %p37
      %p275 = pneg %p61
      %p276 = pneg %p58
      %p277 = pneg %p82
      %p278 = pneg %p79
      %p279 = pneg %p103
      %p280 = pneg %p100
      %p281 = pneg %p124
      %p282 = pneg %p121
      %p283 = pneg %p145
      %p284 = pneg %p142
      %p285 = pneg %p166
      %p286 = pneg %p163
      %p287 = pneg %p187
      %p288 = pneg %p184
      %p289 = pneg %p213
      %p290 = pneg %p210
      %p291 = scmp.lt.s32.totalorder %s19, 1
      %s292 = scalar_select %p291, %s19, 1
      %s293 = smul.addr %s292, 3
      %s294 = smul.addr %s293, 8
      %s295 = scalar_lea.vmem %s8, %s294
      %p296 = scmp.lt.s32.totalorder %s19, 1
      %s297 = scalar_select %p296, %s19, 1
      %s298 = smul.addr %s297, 3
      %s299 = smul.addr %s298, 8
      %s300 = scalar_lea.vmem %s0, %s299
      %p301 = scmp.lt.s32.totalorder %s19, 1
      %s302 = scalar_select %p301, %s19, 1
      %s303 = smul.addr %s302, 3
      %s304 = smul.addr %s303, 8
      %s305 = scalar_lea.vmem %s8, %s304
      %v307 = vld [vmem:[%s300] sm:$0xff]
      %v308 = vld [vmem:[%s300 + $0x8] sm:$0xff]
      %v309 = vld [vmem:[%s300 + $0x10] sm:$0x1]
      %v310 = vld [vmem:[%s1] sm:$0xff]
      %v311 = vld [vmem:[%s1 + $0x8] sm:$0xff]
      %v312 = vld [vmem:[%s1 + $0x10] sm:$0x1]
      %v313 = vld [vmem:[%s2] sm:$0x1]
      %v314 = vld [vmem:[%s3] sm:$0x1]
      %vm315 = vcmask 261120
      %v316 = vsel %vm315, %v307, 0.0
      %317 = vadd.xlane.f32.xlu0 %v316
      %v318 = vpop.xlane.xlu0 %317
      %v319 = vsel %vm315, %v308, 0.0
      %320 = vadd.xlane.f32.xlu0 %v319
      %v321 = vpop.xlane.xlu0 %320
      %vm322 = vcmask 253952
      %v323 = vsel %vm322, %v309, 0.0
      %324 = vadd.xlane.f32.xlu0 %v323
      %v325 = vpop.xlane.xlu0 %324
      %v326 = vrcp.pop 32.0
      %v327 = vmul.f32 %v318, %v326
      %v328 = vmul.f32 %v321, %v326
      %v329 = vmul.f32 %v325, %v326
      %v330 = vsub.f32 %v307, %v327
      %v331 = vsub.f32 %v308, %v328
      %v332 = vsub.f32 %v309, %v329
      %v333 = vmul.f32 %v330, %v330
      %v334 = vmul.f32 %v331, %v331
      %v335 = vmul.f32 %v332, %v332
      %v336 = vsel %vm315, %v333, 0.0
      %337 = vadd.xlane.f32.xlu0 %v336
      %v338 = vpop.xlane.xlu0 %337
      %v339 = vsel %vm315, %v334, 0.0
      %340 = vadd.xlane.f32.xlu0 %v339
      %v341 = vpop.xlane.xlu0 %340
      %v342 = vsel %vm322, %v335, 0.0
      %343 = vadd.xlane.f32.xlu0 %v342
      %v344 = vpop.xlane.xlu0 %343
      %v345 = vmul.f32 %v338, %v326
      %v346 = vmul.f32 %v341, %v326
      %v347 = vmul.f32 %v344, %v326
      %v348 = vadd.f32 %v345, 1e-06
      %v349 = vadd.f32 %v346, 1e-06
      %v350 = vadd.f32 %v347, 1e-06
      %v351 = vrsqrt.pop %v348
      %v352 = vrsqrt.pop %v349
      %v353 = vrsqrt.pop %v350
      %v354 = vmul.f32 %v330, %v351
      %v355 = vmul.f32 %v331, %v352
      %v356 = vmul.f32 %v332, %v353
      %v358 = vlaneseq
      %v359 = vshrl.u32 %v358, 7
      %v360 = vsub.s32 0, %v359
      %v361 = vrot.slane %v313, %v360
      %v363 = vmul.f32 %v354, %v361
      %v364 = vmul.f32 %v355, %v361
      %v365 = vmul.f32 %v356, %v361
      %v367 = vlaneseq
      %v368 = vshrl.u32 %v367, 7
      %v369 = vsub.s32 0, %v368
      %v370 = vrot.slane %v314, %v369
      %v372 = vadd.f32 %v363, %v370
      %v373 = vadd.f32 %v364, %v370
      %v374 = vadd.f32 %v365, %v370
      %v375 = vpack.c.bf16 %v373, %v372
      %v376 = vpack.c.bf16 %v374, %v374
      %v377 = vld [vmem:[%s4] sm:$0xf]
      %v378 = vld [vmem:[%s4 + $0x4] sm:$0xf]
      %v379 = vld [vmem:[%s4 + $0x8] sm:$0xf]
      %v380 = vld [vmem:[%s4 + $0xc] sm:$0xf]
      %v381 = vld [vmem:[%s5] sm:$0x1]
      %v383 = vlaneseq
      %v384 = vshrl.u32 %v383, 7
      %v385 = vsub.s32 0, %v384
      %v386 = vrot.slane %v381, %v385
      %v392 = vunpack.c.l.b16 %v377
      %v393 = vunpack.c.l.b16 %v378
      %v394 = vunpack.c.l.b16 %v379
      %v395 = vunpack.c.l.b16 %v380
      %v396 = vpack.c.b16 %v393, %v392
      %v397 = vpack.c.b16 %v395, %v394
      %v401 = vsel %vm315, %v375, 0
      %v404 = vsel %vm315, %v376, 0
      %406 = vmatprep.subr.bf16.mxu0 0
      %407 = vmatpush1.bf16.msra.mxu0 %v396
      %408 = vmatprep.subr.bf16.mxu0 0
      %409 = vmatpush1.bf16.msra.mxu0 %v397
      %410 = vmatprep.subr.bf16.mxu0 0
      %411 = vmatpush1.bf16.msra.mxu0 0
      %412 = vmatprep.subr.bf16.mxu0 0
      %413 = vmatpush1.bf16.msra.mxu0 0
      %414 = vmatprep.subr.bf16.mxu0 0
      %415 = vmatpush1.bf16.msra.mxu0 0
      %416 = vmatprep.subr.bf16.mxu0 0
      %417 = vmatpush1.bf16.msra.mxu0 0
      %418 = vmatprep.subr.bf16.mxu0 0
      %419 = vmatpush1.bf16.msra.mxu0 0
      %420 = vmatprep.subr.bf16.mxu0 0
      %421 = vmatpush1.bf16.msra.mxu0 0
      %422 = vmatprep.subr.bf16.mxu0 0
      %423 = vmatpush1.bf16.msra.mxu0 0
      %424 = vmatprep.subr.bf16.mxu0 0
      %425 = vmatpush1.bf16.msra.mxu0 0
      %426 = vmatprep.subr.bf16.mxu0 0
      %427 = vmatpush1.bf16.msra.mxu0 0
      %428 = vmatprep.subr.bf16.mxu0 0
      %429 = vmatpush1.bf16.msra.mxu0 0
      %430 = vmatprep.subr.bf16.mxu0 0
      %431 = vmatpush1.bf16.msra.mxu0 0
      %432 = vmatprep.subr.bf16.mxu0 0
      %433 = vmatpush1.bf16.msra.mxu0 0
      %434 = vmatprep.subr.bf16.mxu0 0
      %435 = vmatpush1.bf16.msra.mxu0 0
      %436 = vmatprep.subr.bf16.mxu0 0
      %437 = vmatpush1.bf16.msra.mxu0 0
      %438 = vmatprep.mubr.bf16.mxu0 0
      %439 = vmatmul.mubr.bf16.gmra.mrb[0].mxu0 %v401
      %v440 = vpop.f32.mrb[0].mxu0
      %v441 = vadd.f32 %v386, %v440
      %v442 = vpop.f32.mrb[0].mxu0
      %v443 = vpop.f32.mrb[0].mxu0
      %v444 = vadd.f32 %v386, %v443
      %v445 = vpop.f32.mrb[0].mxu0
      %446 = vmatprep.mubr.bf16.mxu0 0
      %447 = vmatmul.mubr.bf16.gmra.mrb[0].mxu0 %v404
      %v448 = vpop.f32.mrb[0].mxu0
      %v449 = vadd.f32 %v386, %v448
      %v450 = vpop.f32.mrb[0].mxu0
      %v451 = vpop.f32.mrb[0].mxu0
      %v452 = vpop.f32.mrb[0].mxu0
      %453 = vdwg.mxu0
      %457 = vrot.lane.b32.xlu0 %v310, 32
      %v458 = vpop.permute.xlu0 %457
      %459 = vrot.lane.b32.xlu0 %v311, 32
      %v460 = vpop.permute.xlu0 %459
      %461 = vrot.lane.b32.xlu0 %v312, 32
      %v462 = vpop.permute.xlu0 %461
      %v466 = vadd.f32 %v441, %v458
      %v467 = vadd.f32 %v444, %v460
      %v468 = vadd.f32 %v449, %v462
      %469 = vrot.lane.b32.xlu0 %v310, 64
      %v470 = vpop.permute.xlu0 %469
      %471 = vrot.lane.b32.xlu0 %v311, 64
      %v472 = vpop.permute.xlu0 %471
      %473 = vrot.lane.b32.xlu0 %v312, 64
      %v474 = vpop.permute.xlu0 %473
      %v478 = vadd.f32 %v441, %v470
      %v479 = vadd.f32 %v444, %v472
      %v480 = vadd.f32 %v449, %v474
      %v481 = vpack.c.bf16 %v444, %v441
      %v482 = vpack.c.bf16 %v449, %v449
      %v483 = vpack.c.bf16 %v467, %v466
      %v484 = vpack.c.bf16 %v468, %v468
      %v485 = vpack.c.bf16 %v479, %v478
      %v486 = vpack.c.bf16 %v480, %v480
      %489 = vrot.lane.b32.xlu0 %v483, 96
      %v490 = vpop.permute.xlu0 %489
      %491 = vrot.lane.b32.xlu0 %v484, 96
      %v492 = vpop.permute.xlu0 %491
      %vm493 = vcmask 64512
      %v495 = vsel %vm493, %v481, 0
      %v498 = vsel %vm493, %v482, 0
      %v501 = vsel %vm493, %v490, 0
      %v504 = vsel %vm493, %v492, 0
      %506 = vmatprep.subr.bf16.mxu0 0
      %507 = vmatpush1.bf16.xpose.msra.mxu0 %v501
      %508 = vmatprep.subr.bf16.mxu0 0
      %509 = vmatpush1.bf16.xpose.msra.mxu0 %v504
      %510 = vmatprep.subr.bf16.mxu0 0
      %511 = vmatpush1.bf16.xpose.msra.mxu0 0
      %512 = vmatprep.subr.bf16.mxu0 0
      %513 = vmatpush1.bf16.xpose.msra.mxu0 0
      %514 = vmatprep.subr.bf16.mxu0 0
      %515 = vmatpush1.bf16.xpose.msra.mxu0 0
      %516 = vmatprep.subr.bf16.mxu0 0
      %517 = vmatpush1.bf16.xpose.msra.mxu0 0
      %518 = vmatprep.subr.bf16.mxu0 0
      %519 = vmatpush1.bf16.xpose.msra.mxu0 0
      %520 = vmatprep.subr.bf16.mxu0 0
      %521 = vmatpush1.bf16.xpose.msra.mxu0 0
      %522 = vmatprep.subr.bf16.mxu0 0
      %523 = vmatpush1.bf16.xpose.msra.mxu0 0
      %524 = vmatprep.subr.bf16.mxu0 0
      %525 = vmatpush1.bf16.xpose.msra.mxu0 0
      %526 = vmatprep.subr.bf16.mxu0 0
      %527 = vmatpush1.bf16.xpose.msra.mxu0 0
      %528 = vmatprep.subr.bf16.mxu0 0
      %529 = vmatpush1.bf16.xpose.msra.mxu0 0
      %530 = vmatprep.subr.bf16.mxu0 0
      %531 = vmatpush1.bf16.xpose.msra.mxu0 0
      %532 = vmatprep.subr.bf16.mxu0 0
      %533 = vmatpush1.bf16.xpose.msra.mxu0 0
      %534 = vmatprep.subr.bf16.mxu0 0
      %535 = vmatpush1.bf16.xpose.msra.mxu0 0
      %536 = vmatprep.subr.bf16.mxu0 0
      %537 = vmatpush1.bf16.xpose.msra.mxu0 0
      %538 = vmatprep.mubr.bf16.mxu0 0
      %539 = vmatmul.mubr.bf16.gmra.mrb[0].mxu0 %v495
      %v540 = vpop.f32.mrb[0].mxu0
      %v541 = vadd.f32 0.0, %v540
      %v542 = vpop.f32.mrb[0].mxu0
      %v543 = vpop.f32.mrb[0].mxu0
      %v544 = vadd.f32 0.0, %v543
      %v545 = vpop.f32.mrb[0].mxu0
      %546 = vmatprep.mubr.bf16.mxu0 0
      %547 = vmatmul.mubr.bf16.gmra.mrb[0].mxu0 %v498
      %v548 = vpop.f32.mrb[0].mxu0
      %v549 = vadd.f32 0.0, %v548
      %v550 = vpop.f32.mrb[0].mxu0
      %v551 = vpop.f32.mrb[0].mxu0
      %v552 = vpop.f32.mrb[0].mxu0
      %553 = vdwg.mxu0
      %v554 = vmul.f32 %v541, 0.35355338
      %v555 = vmul.f32 %v544, 0.35355338
      %v556 = vmul.f32 %v549, 0.35355338
      %vm557 = vcmask 138240
      %v558 = vsel %vm557, %v554, -inf
      %559 = vmax.xlane.f32.xlu0 %v558
      %v560 = vpop.xlane.xlu0 %559
      %v561 = vsel %vm557, %v555, -inf
      %562 = vmax.xlane.f32.xlu0 %v561
      %v563 = vpop.xlane.xlu0 %562
      %vm564 = vcmask 131072
      %v565 = vsel %vm564, %v556, -inf
      %566 = vmax.xlane.f32.xlu0 %v565
      %v567 = vpop.xlane.xlu0 %566
      %v568 = vsub.f32 %v554, %v560
      %v569 = vsub.f32 %v555, %v563
      %v570 = vsub.f32 %v556, %v567
      %v571 = vmul.f32 %v568, 1.442695
      %v572 = vpow.pop %v571
      %v573 = vmul.f32 %v569, 1.442695
      %v574 = vpow.pop %v573
      %v575 = vmul.f32 %v570, 1.442695
      %v576 = vpow.pop %v575
      %v577 = vsel %vm557, %v572, 0.0
      %578 = vadd.xlane.f32.xlu0 %v577
      %v579 = vpop.xlane.xlu0 %578
      %v580 = vsel %vm557, %v574, 0.0
      %581 = vadd.xlane.f32.xlu0 %v580
      %v582 = vpop.xlane.xlu0 %581
      %v583 = vsel %vm564, %v576, 0.0
      %584 = vadd.xlane.f32.xlu0 %v583
      %v585 = vpop.xlane.xlu0 %584
      %v586 = vrcp.pop %v579
      %v587 = vmul.f32 %v572, %v586
      %v588 = vrcp.pop %v582
      %v589 = vmul.f32 %v574, %v588
      %v590 = vrcp.pop %v585
      %v591 = vmul.f32 %v576, %v590
      %v592 = vpack.c.bf16 %v589, %v587
      %v593 = vpack.c.bf16 %v591, %v591
      %596 = vrot.lane.b32.xlu0 %v485, 64
      %v597 = vpop.permute.xlu0 %596
      %598 = vrot.lane.b32.xlu0 %v486, 64
      %v599 = vpop.permute.xlu0 %598
      %v602 = vsel %vm557, %v592, 0
      %v605 = vsel %vm557, %v593, 0
      %vm607 = vcmask 1040384
      %v608 = vsel 0, 4294967295, 65535
      %v609 = vsel %vm607, %v608, 0
      %v611 = vand.u32 %v599, %v609
      %613 = vmatprep.subr.bf16.mxu0 0
      %614 = vmatpush1.bf16.msra.mxu0 %v597
      %615 = vmatprep.subr.bf16.mxu0 0
      %616 = vmatpush1.bf16.msra.mxu0 %v611
      %617 = vmatprep.subr.bf16.mxu0 0
      %618 = vmatpush1.bf16.msra.mxu0 0
      %619 = vmatprep.subr.bf16.mxu0 0
      %620 = vmatpush1.bf16.msra.mxu0 0
      %621 = vmatprep.subr.bf16.mxu0 0
      %622 = vmatpush1.bf16.msra.mxu0 0
      %623 = vmatprep.subr.bf16.mxu0 0
      %624 = vmatpush1.bf16.msra.mxu0 0
      %625 = vmatprep.subr.bf16.mxu0 0
      %626 = vmatpush1.bf16.msra.mxu0 0
      %627 = vmatprep.subr.bf16.mxu0 0
      %628 = vmatpush1.bf16.msra.mxu0 0
      %629 = vmatprep.subr.bf16.mxu0 0
      %630 = vmatpush1.bf16.msra.mxu0 0
      %631 = vmatprep.subr.bf16.mxu0 0
      %632 = vmatpush1.bf16.msra.mxu0 0
      %633 = vmatprep.subr.bf16.mxu0 0
      %634 = vmatpush1.bf16.msra.mxu0 0
      %635 = vmatprep.subr.bf16.mxu0 0
      %636 = vmatpush1.bf16.msra.mxu0 0
      %637 = vmatprep.subr.bf16.mxu0 0
      %638 = vmatpush1.bf16.msra.mxu0 0
      %639 = vmatprep.subr.bf16.mxu0 0
      %640 = vmatpush1.bf16.msra.mxu0 0
      %641 = vmatprep.subr.bf16.mxu0 0
      %642 = vmatpush1.bf16.msra.mxu0 0
      %643 = vmatprep.subr.bf16.mxu0 0
      %644 = vmatpush1.bf16.msra.mxu0 0
      %645 = vmatprep.mubr.bf16.mxu0 0
      %646 = vmatmul.mubr.bf16.gmra.mrb[0].mxu0 %v602
      %v647 = vpop.f32.mrb[0].mxu0
      %v648 = vadd.f32 0.0, %v647
      %v649 = vpop.f32.mrb[0].mxu0
      %v650 = vpop.f32.mrb[0].mxu0
      %v651 = vadd.f32 0.0, %v650
      %v652 = vpop.f32.mrb[0].mxu0
      %653 = vmatprep.mubr.bf16.mxu0 0
      %654 = vmatmul.mubr.bf16.gmra.mrb[0].mxu0 %v605
      %v655 = vpop.f32.mrb[0].mxu0
      %v656 = vadd.f32 0.0, %v655
      %v657 = vpop.f32.mrb[0].mxu0
      %v658 = vpop.f32.mrb[0].mxu0
      %v659 = vpop.f32.mrb[0].mxu0
      %660 = vdwg.mxu0
      %663 = vrot.lane.b32.xlu0 %v481, 120
      %v664 = vpop.permute.xlu0 %663
      %665 = vrot.lane.b32.xlu0 %v482, 120
      %v666 = vpop.permute.xlu0 %665
      %667 = vrot.lane.b32.xlu0 %v483, 88
      %v668 = vpop.permute.xlu0 %667
      %669 = vrot.lane.b32.xlu0 %v484, 88
      %v670 = vpop.permute.xlu0 %669
      %v672 = vsel %vm493, %v664, 0
      %v675 = vsel %vm493, %v666, 0
      %v678 = vsel %vm493, %v668, 0
      %v681 = vsel %vm493, %v670, 0
      %683 = vmatprep.subr.bf16.mxu0 0
      %684 = vmatpush1.bf16.xpose.msra.mxu0 %v678
      %685 = vmatprep.subr.bf16.mxu0 0
      %686 = vmatpush1.bf16.xpose.msra.mxu0 %v681
      %687 = vmatprep.subr.bf16.mxu0 0
      %688 = vmatpush1.bf16.xpose.msra.mxu0 0
      %689 = vmatprep.subr.bf16.mxu0 0
      %690 = vmatpush1.bf16.xpose.msra.mxu0 0
      %691 = vmatprep.subr.bf16.mxu0 0
      %692 = vmatpush1.bf16.xpose.msra.mxu0 0
      %693 = vmatprep.subr.bf16.mxu0 0
      %694 = vmatpush1.bf16.xpose.msra.mxu0 0
      %695 = vmatprep.subr.bf16.mxu0 0
      %696 = vmatpush1.bf16.xpose.msra.mxu0 0
      %697 = vmatprep.subr.bf16.mxu0 0
      %698 = vmatpush1.bf16.xpose.msra.mxu0 0
      %699 = vmatprep.subr.bf16.mxu0 0
      %700 = vmatpush1.bf16.xpose.msra.mxu0 0
      %701 = vmatprep.subr.bf16.mxu0 0
      %702 = vmatpush1.bf16.xpose.msra.mxu0 0
      %703 = vmatprep.subr.bf16.mxu0 0
      %704 = vmatpush1.bf16.xpose.msra.mxu0 0
      %705 = vmatprep.subr.bf16.mxu0 0
      %706 = vmatpush1.bf16.xpose.msra.mxu0 0
      %707 = vmatprep.subr.bf16.mxu0 0
      %708 = vmatpush1.bf16.xpose.msra.mxu0 0
      %709 = vmatprep.subr.bf16.mxu0 0
      %710 = vmatpush1.bf16.xpose.msra.mxu0 0
      %711 = vmatprep.subr.bf16.mxu0 0
      %712 = vmatpush1.bf16.xpose.msra.mxu0 0
      %713 = vmatprep.subr.bf16.mxu0 0
      %714 = vmatpush1.bf16.xpose.msra.mxu0 0
      %715 = vmatprep.mubr.bf16.mxu0 0
      %716 = vmatmul.mubr.bf16.gmra.mrb[0].mxu0 %v672
      %v717 = vpop.f32.mrb[0].mxu0
      %v718 = vadd.f32 0.0, %v717
      %v719 = vpop.f32.mrb[0].mxu0
      %v720 = vpop.f32.mrb[0].mxu0
      %v721 = vadd.f32 0.0, %v720
      %v722 = vpop.f32.mrb[0].mxu0
      %723 = vmatprep.mubr.bf16.mxu0 0
      %724 = vmatmul.mubr.bf16.gmra.mrb[0].mxu0 %v675
      %v725 = vpop.f32.mrb[0].mxu0
      %v726 = vadd.f32 0.0, %v725
      %v727 = vpop.f32.mrb[0].mxu0
      %v728 = vpop.f32.mrb[0].mxu0
      %v729 = vpop.f32.mrb[0].mxu0
      %730 = vdwg.mxu0
      %v731 = vmul.f32 %v718, 0.35355338
      %v732 = vmul.f32 %v721, 0.35355338
      %v733 = vmul.f32 %v726, 0.35355338
      %v734 = vsel %vm557, %v731, -inf
      %735 = vmax.xlane.f32.xlu0 %v734
      %v736 = vpop.xlane.xlu0 %735
      %v737 = vsel %vm557, %v732, -inf
      %738 = vmax.xlane.f32.xlu0 %v737
      %v739 = vpop.xlane.xlu0 %738
      %v740 = vsel %vm564, %v733, -inf
      %741 = vmax.xlane.f32.xlu0 %v740
      %v742 = vpop.xlane.xlu0 %741
      %v743 = vsub.f32 %v731, %v736
      %v744 = vsub.f32 %v732, %v739
      %v745 = vsub.f32 %v733, %v742
      %v746 = vmul.f32 %v743, 1.442695
      %v747 = vpow.pop %v746
      %v748 = vmul.f32 %v744, 1.442695
      %v749 = vpow.pop %v748
      %v750 = vmul.f32 %v745, 1.442695
      %v751 = vpow.pop %v750
      %v752 = vsel %vm557, %v747, 0.0
      %753 = vadd.xlane.f32.xlu0 %v752
      %v754 = vpop.xlane.xlu0 %753
      %v755 = vsel %vm557, %v749, 0.0
      %756 = vadd.xlane.f32.xlu0 %v755
      %v757 = vpop.xlane.xlu0 %756
      %v758 = vsel %vm564, %v751, 0.0
      %759 = vadd.xlane.f32.xlu0 %v758
      %v760 = vpop.xlane.xlu0 %759
      %v761 = vrcp.pop %v754
      %v762 = vmul.f32 %v747, %v761
      %v763 = vrcp.pop %v757
      %v764 = vmul.f32 %v749, %v763
      %v765 = vrcp.pop %v760
      %v766 = vmul.f32 %v751, %v765
      %v767 = vpack.c.bf16 %v764, %v762
      %v768 = vpack.c.bf16 %v766, %v766
      %769 = vrot.lane.b32.xlu0 %v485, 56
      %v770 = vpop.permute.xlu0 %769
      %771 = vrot.lane.b32.xlu0 %v486, 56
      %v772 = vpop.permute.xlu0 %771
      %v775 = vsel %vm557, %v767, 0
      %v778 = vsel %vm557, %v768, 0
      %v781 = vand.u32 %v772, %v609
      %783 = vmatprep.subr.bf16.mxu0 0
      %784 = vmatpush1.bf16.msra.mxu0 %v770
      %785 = vmatprep.subr.bf16.mxu0 0
      %786 = vmatpush1.bf16.msra.mxu0 %v781
      %787 = vmatprep.subr.bf16.mxu0 0
      %788 = vmatpush1.bf16.msra.mxu0 0
      %789 = vmatprep.subr.bf16.mxu0 0
      %790 = vmatpush1.bf16.msra.mxu0 0
      %791 = vmatprep.subr.bf16.mxu0 0
      %792 = vmatpush1.bf16.msra.mxu0 0
      %793 = vmatprep.subr.bf16.mxu0 0
      %794 = vmatpush1.bf16.msra.mxu0 0
      %795 = vmatprep.subr.bf16.mxu0 0
      %796 = vmatpush1.bf16.msra.mxu0 0
      %797 = vmatprep.subr.bf16.mxu0 0
      %798 = vmatpush1.bf16.msra.mxu0 0
      %799 = vmatprep.subr.bf16.mxu0 0
      %800 = vmatpush1.bf16.msra.mxu0 0
      %801 = vmatprep.subr.bf16.mxu0 0
      %802 = vmatpush1.bf16.msra.mxu0 0
      %803 = vmatprep.subr.bf16.mxu0 0
      %804 = vmatpush1.bf16.msra.mxu0 0
      %805 = vmatprep.subr.bf16.mxu0 0
      %806 = vmatpush1.bf16.msra.mxu0 0
      %807 = vmatprep.subr.bf16.mxu0 0
      %808 = vmatpush1.bf16.msra.mxu0 0
      %809 = vmatprep.subr.bf16.mxu0 0
      %810 = vmatpush1.bf16.msra.mxu0 0
      %811 = vmatprep.subr.bf16.mxu0 0
      %812 = vmatpush1.bf16.msra.mxu0 0
      %813 = vmatprep.subr.bf16.mxu0 0
      %814 = vmatpush1.bf16.msra.mxu0 0
      %815 = vmatprep.mubr.bf16.mxu0 0
      %816 = vmatmul.mubr.bf16.gmra.mrb[0].mxu0 %v775
      %v817 = vpop.f32.mrb[0].mxu0
      %v818 = vadd.f32 0.0, %v817
      %v819 = vpop.f32.mrb[0].mxu0
      %v820 = vpop.f32.mrb[0].mxu0
      %v821 = vadd.f32 0.0, %v820
      %v822 = vpop.f32.mrb[0].mxu0
      %823 = vmatprep.mubr.bf16.mxu0 0
      %824 = vmatmul.mubr.bf16.gmra.mrb[0].mxu0 %v778
      %v825 = vpop.f32.mrb[0].mxu0
      %v826 = vadd.f32 0.0, %v825
      %v827 = vpop.f32.mrb[0].mxu0
      %v828 = vpop.f32.mrb[0].mxu0
      %v829 = vpop.f32.mrb[0].mxu0
      %830 = vdwg.mxu0
      %831 = vrot.lane.b32.xlu0 %v481, 112
      %v832 = vpop.permute.xlu0 %831
      %833 = vrot.lane.b32.xlu0 %v482, 112
      %v834 = vpop.permute.xlu0 %833
      %835 = vrot.lane.b32.xlu0 %v483, 80
      %v836 = vpop.permute.xlu0 %835
      %837 = vrot.lane.b32.xlu0 %v484, 80
      %v838 = vpop.permute.xlu0 %837
      %v840 = vsel %vm493, %v832, 0
      %v843 = vsel %vm493, %v834, 0
      %v846 = vsel %vm493, %v836, 0
      %v849 = vsel %vm493, %v838, 0
      %851 = vmatprep.subr.bf16.mxu0 0
      %852 = vmatpush1.bf16.xpose.msra.mxu0 %v846
      %853 = vmatprep.subr.bf16.mxu0 0
      %854 = vmatpush1.bf16.xpose.msra.mxu0 %v849
      %855 = vmatprep.subr.bf16.mxu0 0
      %856 = vmatpush1.bf16.xpose.msra.mxu0 0
      %857 = vmatprep.subr.bf16.mxu0 0
      %858 = vmatpush1.bf16.xpose.msra.mxu0 0
      %859 = vmatprep.subr.bf16.mxu0 0
      %860 = vmatpush1.bf16.xpose.msra.mxu0 0
      %861 = vmatprep.subr.bf16.mxu0 0
      %862 = vmatpush1.bf16.xpose.msra.mxu0 0
      %863 = vmatprep.subr.bf16.mxu0 0
      %864 = vmatpush1.bf16.xpose.msra.mxu0 0
      %865 = vmatprep.subr.bf16.mxu0 0
      %866 = vmatpush1.bf16.xpose.msra.mxu0 0
      %867 = vmatprep.subr.bf16.mxu0 0
      %868 = vmatpush1.bf16.xpose.msra.mxu0 0
      %869 = vmatprep.subr.bf16.mxu0 0
      %870 = vmatpush1.bf16.xpose.msra.mxu0 0
      %871 = vmatprep.subr.bf16.mxu0 0
      %872 = vmatpush1.bf16.xpose.msra.mxu0 0
      %873 = vmatprep.subr.bf16.mxu0 0
      %874 = vmatpush1.bf16.xpose.msra.mxu0 0
      %875 = vmatprep.subr.bf16.mxu0 0
      %876 = vmatpush1.bf16.xpose.msra.mxu0 0
      %877 = vmatprep.subr.bf16.mxu0 0
      %878 = vmatpush1.bf16.xpose.msra.mxu0 0
      %879 = vmatprep.subr.bf16.mxu0 0
      %880 = vmatpush1.bf16.xpose.msra.mxu0 0
      %881 = vmatprep.subr.bf16.mxu0 0
      %882 = vmatpush1.bf16.xpose.msra.mxu0 0
      %883 = vmatprep.mubr.bf16.mxu0 0
      %884 = vmatmul.mubr.bf16.gmra.mrb[0].mxu0 %v840
      %v885 = vpop.f32.mrb[0].mxu0
      %v886 = vadd.f32 0.0, %v885
      %v887 = vpop.f32.mrb[0].mxu0
      %v888 = vpop.f32.mrb[0].mxu0
      %v889 = vadd.f32 0.0, %v888
      %v890 = vpop.f32.mrb[0].mxu0
      %891 = vmatprep.mubr.bf16.mxu0 0
      %892 = vmatmul.mubr.bf16.gmra.mrb[0].mxu0 %v843
      %v893 = vpop.f32.mrb[0].mxu0
      %v894 = vadd.f32 0.0, %v893
      %v895 = vpop.f32.mrb[0].mxu0
      %v896 = vpop.f32.mrb[0].mxu0
      %v897 = vpop.f32.mrb[0].mxu0
      %898 = vdwg.mxu0
      %v899 = vmul.f32 %v886, 0.35355338
      %v900 = vmul.f32 %v889, 0.35355338
      %v901 = vmul.f32 %v894, 0.35355338
      %v902 = vsel %vm557, %v899, -inf
      %903 = vmax.xlane.f32.xlu0 %v902
      %v904 = vpop.xlane.xlu0 %903
      %v905 = vsel %vm557, %v900, -inf
      %906 = vmax.xlane.f32.xlu0 %v905
      %v907 = vpop.xlane.xlu0 %906
      %v908 = vsel %vm564, %v901, -inf
      %909 = vmax.xlane.f32.xlu0 %v908
      %v910 = vpop.xlane.xlu0 %909
      %v911 = vsub.f32 %v899, %v904
      %v912 = vsub.f32 %v900, %v907
      %v913 = vsub.f32 %v901, %v910
      %v914 = vmul.f32 %v911, 1.442695
      %v915 = vpow.pop %v914
      %v916 = vmul.f32 %v912, 1.442695
      %v917 = vpow.pop %v916
      %v918 = vmul.f32 %v913, 1.442695
      %v919 = vpow.pop %v918
      %v920 = vsel %vm557, %v915, 0.0
      %921 = vadd.xlane.f32.xlu0 %v920
      %v922 = vpop.xlane.xlu0 %921
      %v923 = vsel %vm557, %v917, 0.0
      %924 = vadd.xlane.f32.xlu0 %v923
      %v925 = vpop.xlane.xlu0 %924
      %v926 = vsel %vm564, %v919, 0.0
      %927 = vadd.xlane.f32.xlu0 %v926
      %v928 = vpop.xlane.xlu0 %927
      %v929 = vrcp.pop %v922
      %v930 = vmul.f32 %v915, %v929
      %v931 = vrcp.pop %v925
      %v932 = vmul.f32 %v917, %v931
      %v933 = vrcp.pop %v928
      %v934 = vmul.f32 %v919, %v933
      %v935 = vpack.c.bf16 %v932, %v930
      %v936 = vpack.c.bf16 %v934, %v934
      %937 = vrot.lane.b32.xlu0 %v485, 48
      %v938 = vpop.permute.xlu0 %937
      %939 = vrot.lane.b32.xlu0 %v486, 48
      %v940 = vpop.permute.xlu0 %939
      %v943 = vsel %vm557, %v935, 0
      %v946 = vsel %vm557, %v936, 0
      %v949 = vand.u32 %v940, %v609
      %951 = vmatprep.subr.bf16.mxu0 0
      %952 = vmatpush1.bf16.msra.mxu0 %v938
      %953 = vmatprep.subr.bf16.mxu0 0
      %954 = vmatpush1.bf16.msra.mxu0 %v949
      %955 = vmatprep.subr.bf16.mxu0 0
      %956 = vmatpush1.bf16.msra.mxu0 0
      %957 = vmatprep.subr.bf16.mxu0 0
      %958 = vmatpush1.bf16.msra.mxu0 0
      %959 = vmatprep.subr.bf16.mxu0 0
      %960 = vmatpush1.bf16.msra.mxu0 0
      %961 = vmatprep.subr.bf16.mxu0 0
      %962 = vmatpush1.bf16.msra.mxu0 0
      %963 = vmatprep.subr.bf16.mxu0 0
      %964 = vmatpush1.bf16.msra.mxu0 0
      %965 = vmatprep.subr.bf16.mxu0 0
      %966 = vmatpush1.bf16.msra.mxu0 0
      %967 = vmatprep.subr.bf16.mxu0 0
      %968 = vmatpush1.bf16.msra.mxu0 0
      %969 = vmatprep.subr.bf16.mxu0 0
      %970 = vmatpush1.bf16.msra.mxu0 0
      %971 = vmatprep.subr.bf16.mxu0 0
      %972 = vmatpush1.bf16.msra.mxu0 0
      %973 = vmatprep.subr.bf16.mxu0 0
      %974 = vmatpush1.bf16.msra.mxu0 0
      %975 = vmatprep.subr.bf16.mxu0 0
      %976 = vmatpush1.bf16.msra.mxu0 0
      %977 = vmatprep.subr.bf16.mxu0 0
      %978 = vmatpush1.bf16.msra.mxu0 0
      %979 = vmatprep.subr.bf16.mxu0 0
      %980 = vmatpush1.bf16.msra.mxu0 0
      %981 = vmatprep.subr.bf16.mxu0 0
      %982 = vmatpush1.bf16.msra.mxu0 0
      %983 = vmatprep.mubr.bf16.mxu0 0
      %984 = vmatmul.mubr.bf16.gmra.mrb[0].mxu0 %v943
      %v985 = vpop.f32.mrb[0].mxu0
      %v986 = vadd.f32 0.0, %v985
      %v987 = vpop.f32.mrb[0].mxu0
      %v988 = vpop.f32.mrb[0].mxu0
      %v989 = vadd.f32 0.0, %v988
      %v990 = vpop.f32.mrb[0].mxu0
      %991 = vmatprep.mubr.bf16.mxu0 0
      %992 = vmatmul.mubr.bf16.gmra.mrb[0].mxu0 %v946
      %v993 = vpop.f32.mrb[0].mxu0
      %v994 = vadd.f32 0.0, %v993
      %v995 = vpop.f32.mrb[0].mxu0
      %v996 = vpop.f32.mrb[0].mxu0
      %v997 = vpop.f32.mrb[0].mxu0
      %998 = vdwg.mxu0
      %999 = vrot.lane.b32.xlu0 %v481, 104
      %v1000 = vpop.permute.xlu0 %999
      %1001 = vrot.lane.b32.xlu0 %v482, 104
      %v1002 = vpop.permute.xlu0 %1001
      %1003 = vrot.lane.b32.xlu0 %v483, 72
      %v1004 = vpop.permute.xlu0 %1003
      %1005 = vrot.lane.b32.xlu0 %v484, 72
      %v1006 = vpop.permute.xlu0 %1005
      %v1008 = vsel %vm493, %v1000, 0
      %v1011 = vsel %vm493, %v1002, 0
      %v1014 = vsel %vm493, %v1004, 0
      %v1017 = vsel %vm493, %v1006, 0
      %1019 = vmatprep.subr.bf16.mxu0 0
      %1020 = vmatpush1.bf16.xpose.msra.mxu0 %v1014
      %1021 = vmatprep.subr.bf16.mxu0 0
      %1022 = vmatpush1.bf16.xpose.msra.mxu0 %v1017
      %1023 = vmatprep.subr.bf16.mxu0 0
      %1024 = vmatpush1.bf16.xpose.msra.mxu0 0
      %1025 = vmatprep.subr.bf16.mxu0 0
      %1026 = vmatpush1.bf16.xpose.msra.mxu0 0
      %1027 = vmatprep.subr.bf16.mxu0 0
      %1028 = vmatpush1.bf16.xpose.msra.mxu0 0
      %1029 = vmatprep.subr.bf16.mxu0 0
      %1030 = vmatpush1.bf16.xpose.msra.mxu0 0
      %1031 = vmatprep.subr.bf16.mxu0 0
      %1032 = vmatpush1.bf16.xpose.msra.mxu0 0
      %1033 = vmatprep.subr.bf16.mxu0 0
      %1034 = vmatpush1.bf16.xpose.msra.mxu0 0
      %1035 = vmatprep.subr.bf16.mxu0 0
      %1036 = vmatpush1.bf16.xpose.msra.mxu0 0
      %1037 = vmatprep.subr.bf16.mxu0 0
      %1038 = vmatpush1.bf16.xpose.msra.mxu0 0
      %1039 = vmatprep.subr.bf16.mxu0 0
      %1040 = vmatpush1.bf16.xpose.msra.mxu0 0
      %1041 = vmatprep.subr.bf16.mxu0 0
      %1042 = vmatpush1.bf16.xpose.msra.mxu0 0
      %1043 = vmatprep.subr.bf16.mxu0 0
      %1044 = vmatpush1.bf16.xpose.msra.mxu0 0
      %1045 = vmatprep.subr.bf16.mxu0 0
      %1046 = vmatpush1.bf16.xpose.msra.mxu0 0
      %1047 = vmatprep.subr.bf16.mxu0 0
      %1048 = vmatpush1.bf16.xpose.msra.mxu0 0
      %1049 = vmatprep.subr.bf16.mxu0 0
      %1050 = vmatpush1.bf16.xpose.msra.mxu0 0
      %1051 = vmatprep.mubr.bf16.mxu0 0
      %1052 = vmatmul.mubr.bf16.gmra.mrb[0].mxu0 %v1008
      %v1053 = vpop.f32.mrb[0].mxu0
      %v1054 = vadd.f32 0.0, %v1053
      %v1055 = vpop.f32.mrb[0].mxu0
      %v1056 = vpop.f32.mrb[0].mxu0
      %v1057 = vadd.f32 0.0, %v1056
      %v1058 = vpop.f32.mrb[0].mxu0
      %1059 = vmatprep.mubr.bf16.mxu0 0
      %1060 = vmatmul.mubr.bf16.gmra.mrb[0].mxu0 %v1011
      %v1061 = vpop.f32.mrb[0].mxu0
      %v1062 = vadd.f32 0.0, %v1061
      %v1063 = vpop.f32.mrb[0].mxu0
      %v1064 = vpop.f32.mrb[0].mxu0
      %v1065 = vpop.f32.mrb[0].mxu0
      %1066 = vdwg.mxu0
      %v1067 = vmul.f32 %v1054, 0.35355338
      %v1068 = vmul.f32 %v1057, 0.35355338
      %v1069 = vmul.f32 %v1062, 0.35355338
      %v1070 = vsel %vm557, %v1067, -inf
      %1071 = vmax.xlane.f32.xlu0 %v1070
      %v1072 = vpop.xlane.xlu0 %1071
      %v1073 = vsel %vm557, %v1068, -inf
      %1074 = vmax.xlane.f32.xlu0 %v1073
      %v1075 = vpop.xlane.xlu0 %1074
      %v1076 = vsel %vm564, %v1069, -inf
      %1077 = vmax.xlane.f32.xlu0 %v1076
      %v1078 = vpop.xlane.xlu0 %1077
      %v1079 = vsub.f32 %v1067, %v1072
      %v1080 = vsub.f32 %v1068, %v1075
      %v1081 = vsub.f32 %v1069, %v1078
      %v1082 = vmul.f32 %v1079, 1.442695
      %v1083 = vpow.pop %v1082
      %v1084 = vmul.f32 %v1080, 1.442695
      %v1085 = vpow.pop %v1084
      %v1086 = vmul.f32 %v1081, 1.442695
      %v1087 = vpow.pop %v1086
      %v1088 = vsel %vm557, %v1083, 0.0
      %1089 = vadd.xlane.f32.xlu0 %v1088
      %v1090 = vpop.xlane.xlu0 %1089
      %v1091 = vsel %vm557, %v1085, 0.0
      %1092 = vadd.xlane.f32.xlu0 %v1091
      %v1093 = vpop.xlane.xlu0 %1092
      %v1094 = vsel %vm564, %v1087, 0.0
      %1095 = vadd.xlane.f32.xlu0 %v1094
      %v1096 = vpop.xlane.xlu0 %1095
      %v1097 = vrcp.pop %v1090
      %v1098 = vmul.f32 %v1083, %v1097
      %v1099 = vrcp.pop %v1093
      %v1100 = vmul.f32 %v1085, %v1099
      %v1101 = vrcp.pop %v1096
      %v1102 = vmul.f32 %v1087, %v1101
      %v1103 = vpack.c.bf16 %v1100, %v1098
      %v1104 = vpack.c.bf16 %v1102, %v1102
      %1105 = vrot.lane.b32.xlu0 %v485, 40
      %v1106 = vpop.permute.xlu0 %1105
      %1107 = vrot.lane.b32.xlu0 %v486, 40
      %v1108 = vpop.permute.xlu0 %1107
      %v1111 = vsel %vm557, %v1103, 0
      %v1114 = vsel %vm557, %v1104, 0
      %v1117 = vand.u32 %v1108, %v609
      %1119 = vmatprep.subr.bf16.mxu0 0
      %1120 = vmatpush1.bf16.msra.mxu0 %v1106
      %1121 = vmatprep.subr.bf16.mxu0 0
      %1122 = vmatpush1.bf16.msra.mxu0 %v1117
      %1123 = vmatprep.subr.bf16.mxu0 0
      %1124 = vmatpush1.bf16.msra.mxu0 0
      %1125 = vmatprep.subr.bf16.mxu0 0
      %1126 = vmatpush1.bf16.msra.mxu0 0
      %1127 = vmatprep.subr.bf16.mxu0 0
      %1128 = vmatpush1.bf16.msra.mxu0 0
      %1129 = vmatprep.subr.bf16.mxu0 0
      %1130 = vmatpush1.bf16.msra.mxu0 0
      %1131 = vmatprep.subr.bf16.mxu0 0
      %1132 = vmatpush1.bf16.msra.mxu0 0
      %1133 = vmatprep.subr.bf16.mxu0 0
      %1134 = vmatpush1.bf16.msra.mxu0 0
      %1135 = vmatprep.subr.bf16.mxu0 0
      %1136 = vmatpush1.bf16.msra.mxu0 0
      %1137 = vmatprep.subr.bf16.mxu0 0
      %1138 = vmatpush1.bf16.msra.mxu0 0
      %1139 = vmatprep.subr.bf16.mxu0 0
      %1140 = vmatpush1.bf16.msra.mxu0 0
      %1141 = vmatprep.subr.bf16.mxu0 0
      %1142 = vmatpush1.bf16.msra.mxu0 0
      %1143 = vmatprep.subr.bf16.mxu0 0
      %1144 = vmatpush1.bf16.msra.mxu0 0
      %1145 = vmatprep.subr.bf16.mxu0 0
      %1146 = vmatpush1.bf16.msra.mxu0 0
      %1147 = vmatprep.subr.bf16.mxu0 0
      %1148 = vmatpush1.bf16.msra.mxu0 0
      %1149 = vmatprep.subr.bf16.mxu0 0
      %1150 = vmatpush1.bf16.msra.mxu0 0
      %1151 = vmatprep.mubr.bf16.mxu0 0
      %1152 = vmatmul.mubr.bf16.gmra.mrb[0].mxu0 %v1111
      %v1153 = vpop.f32.mrb[0].mxu0
      %v1154 = vadd.f32 0.0, %v1153
      %v1155 = vpop.f32.mrb[0].mxu0
      %v1156 = vpop.f32.mrb[0].mxu0
      %v1157 = vadd.f32 0.0, %v1156
      %v1158 = vpop.f32.mrb[0].mxu0
      %1159 = vmatprep.mubr.bf16.mxu0 0
      %1160 = vmatmul.mubr.bf16.gmra.mrb[0].mxu0 %v1114
      %v1161 = vpop.f32.mrb[0].mxu0
      %v1162 = vadd.f32 0.0, %v1161
      %v1163 = vpop.f32.mrb[0].mxu0
      %v1164 = vpop.f32.mrb[0].mxu0
      %v1165 = vpop.f32.mrb[0].mxu0
      %1166 = vdwg.mxu0
      %1170 = vrot.lane.b32.xlu0 %v818, 8
      %v1171 = vpop.permute.xlu0 %1170
      %1172 = vrot.lane.b32.xlu0 %v821, 8
      %v1173 = vpop.permute.xlu0 %1172
      %1174 = vrot.lane.b32.xlu0 %v826, 8
      %v1175 = vpop.permute.xlu0 %1174
      %1182 = vrot.lane.b32.xlu0 %v986, 16
      %v1183 = vpop.permute.xlu0 %1182
      %1184 = vrot.lane.b32.xlu0 %v989, 16
      %v1185 = vpop.permute.xlu0 %1184
      %1186 = vrot.lane.b32.xlu0 %v994, 16
      %v1187 = vpop.permute.xlu0 %1186
      %1194 = vrot.lane.b32.xlu0 %v1154, 24
      %v1195 = vpop.permute.xlu0 %1194
      %1196 = vrot.lane.b32.xlu0 %v1157, 24
      %v1197 = vpop.permute.xlu0 %1196
      %1198 = vrot.lane.b32.xlu0 %v1162, 24
      %v1199 = vpop.permute.xlu0 %1198
      %v1203 = vsel %vm493, %v648, %v1171
      %v1204 = vsel %vm493, %v651, %v1173
      %v1205 = vsel %vm493, %v656, %v1175
      %vm1206 = vcmask 130048
      %v1207 = vsel %vm1206, %v1203, %v1183
      %v1208 = vsel %vm1206, %v1204, %v1185
      %v1209 = vsel %vm1206, %v1205, %v1187
      %vm1210 = vcmask 195584
      %v1211 = vsel %vm1210, %v1207, %v1195
      %v1212 = vsel %vm1210, %v1208, %v1197
      %v1213 = vsel %vm1210, %v1209, %v1199
      %v1214 = vpack.c.bf16 %v1212, %v1211
      %v1215 = vpack.c.bf16 %v1213, %v1213
      %v1216 = vld [vmem:[%s6] sm:$0xf]
      %v1217 = vld [vmem:[%s6 + $0x4] sm:$0xf]
      %v1218 = vld [vmem:[%s6 + $0x8] sm:$0xf]
      %v1219 = vld [vmem:[%s6 + $0xc] sm:$0xf]
      %v1220 = vld [vmem:[%s7] sm:$0x1]
      %v1222 = vlaneseq
      %v1223 = vshrl.u32 %v1222, 7
      %v1224 = vsub.s32 0, %v1223
      %v1225 = vrot.slane %v1220, %v1224
      %v1231 = vunpack.c.l.b16 %v1216
      %v1232 = vunpack.c.l.b16 %v1217
      %v1233 = vunpack.c.l.b16 %v1218
      %v1234 = vunpack.c.l.b16 %v1219
      %v1235 = vpack.c.b16 %v1232, %v1231
      %v1236 = vpack.c.b16 %v1234, %v1233
      %v1240 = vsel %vm315, %v1214, 0
      %v1243 = vsel %vm315, %v1215, 0
      %1245 = vmatprep.subr.bf16.mxu0 0
      %1246 = vmatpush1.bf16.msra.mxu0 %v1235
      %1247 = vmatprep.subr.bf16.mxu0 0
      %1248 = vmatpush1.bf16.msra.mxu0 %v1236
      %1249 = vmatprep.subr.bf16.mxu0 0
      %1250 = vmatpush1.bf16.msra.mxu0 0
      %1251 = vmatprep.subr.bf16.mxu0 0
      %1252 = vmatpush1.bf16.msra.mxu0 0
      %1253 = vmatprep.subr.bf16.mxu0 0
      %1254 = vmatpush1.bf16.msra.mxu0 0
      %1255 = vmatprep.subr.bf16.mxu0 0
      %1256 = vmatpush1.bf16.msra.mxu0 0
      %1257 = vmatprep.subr.bf16.mxu0 0
      %1258 = vmatpush1.bf16.msra.mxu0 0
      %1259 = vmatprep.subr.bf16.mxu0 0
      %1260 = vmatpush1.bf16.msra.mxu0 0
      %1261 = vmatprep.subr.bf16.mxu0 0
      %1262 = vmatpush1.bf16.msra.mxu0 0
      %1263 = vmatprep.subr.bf16.mxu0 0
      %1264 = vmatpush1.bf16.msra.mxu0 0
      %1265 = vmatprep.subr.bf16.mxu0 0
      %1266 = vmatpush1.bf16.msra.mxu0 0
      %1267 = vmatprep.subr.bf16.mxu0 0
      %1268 = vmatpush1.bf16.msra.mxu0 0
      %1269 = vmatprep.subr.bf16.mxu0 0
      %1270 = vmatpush1.bf16.msra.mxu0 0
      %1271 = vmatprep.subr.bf16.mxu0 0
      %1272 = vmatpush1.bf16.msra.mxu0 0
      %1273 = vmatprep.subr.bf16.mxu0 0
      %1274 = vmatpush1.bf16.msra.mxu0 0
      %1275 = vmatprep.subr.bf16.mxu0 0
      %1276 = vmatpush1.bf16.msra.mxu0 0
      %1277 = vmatprep.mubr.bf16.mxu0 0
      %1278 = vmatmul.mubr.bf16.gmra.mrb[0].mxu0 %v1240
      %v1279 = vpop.f32.mrb[0].mxu0
      %v1280 = vadd.f32 %v1225, %v1279
      %v1281 = vpop.f32.mrb[0].mxu0
      %v1282 = vpop.f32.mrb[0].mxu0
      %v1283 = vadd.f32 %v1225, %v1282
      %v1284 = vpop.f32.mrb[0].mxu0
      %1285 = vmatprep.mubr.bf16.mxu0 0
      %1286 = vmatmul.mubr.bf16.gmra.mrb[0].mxu0 %v1243
      %v1287 = vpop.f32.mrb[0].mxu0
      %v1288 = vadd.f32 %v1225, %v1287
      %v1289 = vpop.f32.mrb[0].mxu0
      %v1290 = vpop.f32.mrb[0].mxu0
      %v1291 = vpop.f32.mrb[0].mxu0
      %1292 = vdwg.mxu0
      %v1293 = vadd.f32 %v1280, %v307
      %v1294 = vadd.f32 %v1283, %v308
      %v1295 = vadd.f32 %v1288, %v309
      %1296 = vst.msk [vmem:[%s305] sm:$0xff] %vm315, %v1293
      %1297 = vst.msk [vmem:[%s305 + $0x8] sm:$0xff] %vm315, %v1294
      %1298 = vst.msk [vmem:[%s305 + $0x10] sm:$0x1] %vm322, %v1295
      %p1299 = scmp.lt.s32.totalorder %s19, 1
      %s1300 = scalar_select %p1299, %s19, 1
      %s1301 = smul.addr %s1300, 3
      %s1302 = smul.addr %s1301, 8
      %s1303 = scalar_lea.vmem %s8, %s1302
      // Predicated region
      $region53: #{tpu_custom_call.1} parent=51 // pred_check
        %p1304 = pneg %p210
      $region54: #{tpu_custom_call.1} parent=51 // pred_check_branch
        %1306 = sbr.rel (%p1304) target = $region56
      $region55: #{tpu_custom_call.1} parent=51 // pred_region
        _
      $region56: #{tpu_custom_call.1} parent=51 // pred_fallthru
        _
    $region52: #{tpu_custom_call.1} parent=5 // pred_fallthru
      _
    %p1307 = scmp.le.s32.totalorder 2, %s14
    // Predicated region
    $region57: #{tpu_custom_call.1} parent=5 // pred_check
      %p1308 = pneg %p1307
    $region58: #{tpu_custom_call.1} parent=5 // pred_check_branch
      %1310 = sbr.rel (%p1308) target = $region60
    $region59: #{tpu_custom_call.1} parent=5 // pred_region
      %s1311 = ssub.s32 %s14, 2
      // Predicated region
      $region61: #{tpu_custom_call.1} parent=59 // pred_check
        %p1312 = pneg %p216
      $region62: #{tpu_custom_call.1} parent=59 // pred_check_branch
        %1314 = sbr.rel (%p1312) target = $region64
      $region63: #{tpu_custom_call.1} parent=59 // pred_region
        %p1315 = scmp.lt.s32.totalorder %s20, 1
        %s1316 = scalar_select %p1315, %s20, 1
        %s1317 = smul.addr %s1316, 3
        %s1318 = smul.addr %s1317, 8
        %s1319 = scalar_lea.vmem %s8, %s1318
      $region64: #{tpu_custom_call.1} parent=59 // pred_fallthru
        _
    $region60: #{tpu_custom_call.1} parent=5 // pred_fallthru
      _
  $region6: #{tpu_custom_call.1} parent=0 // loop_footer
    %s18 = sadd.s32 1, %s14
  $region7: #{tpu_custom_call.1} parent=0 // loop_footer_branch
    %13 = sbr.rel target = $region3
  $region8: #{tpu_custom_call.1} parent=0 // loop_exit
    _

</llo_original>
